<compile_context>
chip_gen: v7x
topology: tpu7x:2x2x1
jax: 0.10.0
libtpu: 0.0.40
codegen_flags: <defaults>
</compile_context>

<pallas_src>
import jax
import jax.numpy as jnp
from jax import lax
from jax.experimental import pallas as pl
from jax.experimental.pallas import tpu as pltpu

# ----------------------------- config -------------------------------------
VOCAB = 100
HIDDEN = 32
LAYERS = 2
HEADS = 2
HEAD_DIM = HIDDEN // HEADS
INTER = 64
MAX_POS = 16
TYPE_VOCAB = 2
NUM_CLASSES = 3
BATCH = 2
SEQ = 8
LN_EPS = 1e-12
CLS_PAD = 128                  # lane-dense classifier output width
MM_DTYPE = jnp.bfloat16        # MXU operand dtype (f32 accumulate). Use f32 on v5e if desired.


# ----------------------------- fused kernel --------------------------------
def _bert_fused_kernel(x_ref, mask_ref, emb_ln_ref,
                       qkv_w_ref, qkv_b_ref, wo_ref, bo_ref,
                       w1_ref, b1_ref, w2_ref, b2_ref, ln_ref,
                       pool_w_ref, pool_b_ref, cls_w_ref, cls_b_ref,
                       logits_ref, probs_ref):
    S, H, Hn, Dh = SEQ, HIDDEN, HEADS, HEAD_DIM

    def mm(x, w, b):
        # bf16 (or f32) MXU operands, f32 accumulation, f32 bias add.
        return jnp.dot(x.astype(w.dtype), w,
                       preferred_element_type=jnp.float32) + b

    def layernorm(x, g, b):
        mu = jnp.mean(x, axis=-1, keepdims=True)
        var = jnp.mean((x - mu) * (x - mu), axis=-1, keepdims=True)
        return (x - mu) * lax.rsqrt(var + LN_EPS) * g + b

    def gelu(x):
        # tanh-approx GELU (gelu_new).  # TODO(synk): erf-based GELU if the reference uses it.
        c = jnp.float32(0.7978845608028654)  # sqrt(2/pi)
        return 0.5 * x * (1.0 + jnp.tanh(c * (x + 0.044715 * x * x * x)))

    x = x_ref[0].astype(jnp.float32)          # [S, H]  (this program's batch element)
    mask_row = mask_ref[0]                    # [1, S]  additive key mask
    h = layernorm(x, emb_ln_ref[0:1, :], emb_ln_ref[1:2, :])

    for l in range(LAYERS):                   # static unroll (LAYERS=2)
        x_res = h                             # [S, H]

        # Packed QKV projection: one [S,H] x [H,3H] matmul.
        qkv = mm(h, qkv_w_ref[l], qkv_b_ref[l])          # [S, 3H] f32
        ctx_heads = []
        for hd in range(Hn):                  # static unroll over heads
            q = qkv[:, hd * Dh:(hd + 1) * Dh]            # [S, Dh]
            k = qkv[:, H + hd * Dh:H + (hd + 1) * Dh]
            v = qkv[:, 2 * H + hd * Dh:2 * H + (hd + 1) * Dh]
            # 1/sqrt(Dh) is folded into wq/bq at packing time.
            scores = lax.dot_general(
                q.astype(MM_DTYPE), k.astype(MM_DTYPE),
                (((1,), (1,)), ((), ())),                 # q @ k^T
                preferred_element_type=jnp.float32)       # [S, S]
            scores = scores + mask_row
            m = jnp.max(scores, axis=-1, keepdims=True)
            e = jnp.exp(scores - m)
            denom = jnp.sum(e, axis=-1, keepdims=True)
            probs = e * pl.reciprocal(denom, approx=True)  # EUP reciprocal
            r0 = (l * Hn + hd) * S
            probs_ref[0, r0:r0 + S, :] = probs
            ctx_heads.append(
                jnp.dot(probs.astype(MM_DTYPE), v.astype(MM_DTYPE),
                        preferred_element_type=jnp.float32))   # [S, Dh]
        ctx = jnp.concatenate(ctx_heads, axis=-1)        # [S, H] (heads merged in-kernel)

        attn_out = mm(ctx, wo_ref[l], bo_ref[l])
        ln_p = ln_ref[l]                                  # [4, H]
        h = layernorm(attn_out + x_res, ln_p[0:1, :], ln_p[1:2, :])

        ffn = gelu(mm(h, w1_ref[l], b1_ref[l]))
        ffn = mm(ffn, w2_ref[l], b2_ref[l])
        h = layernorm(ffn + h, ln_p[2:3, :], ln_p[3:4, :])

    # Pooler on the CLS token, then classifier (dropout p=0.0 -> identity).
    cls_tok = h[0:1, :]                                   # [1, H]
    pooled = jnp.tanh(mm(cls_tok, pool_w_ref[...], pool_b_ref[...]))
    logits = mm(pooled, cls_w_ref[...], cls_b_ref[...])   # [1, CLS_PAD] lane-dense
    logits_ref[0, :, :] = logits


def _fused_forward(x_emb, add_mask, p):
    B = x_emb.shape[0]
    rows = LAYERS * HEADS * SEQ
    kernel = pl.pallas_call(
        _bert_fused_kernel,
        grid=(B,),
        in_specs=[
            pl.BlockSpec((1, SEQ, HIDDEN), lambda b: (b, 0, 0)),            # x_emb
            pl.BlockSpec((1, 1, SEQ), lambda b: (b, 0, 0)),                 # add_mask
            pl.BlockSpec((2, HIDDEN), lambda b: (0, 0)),                    # emb LN g/b
            pl.BlockSpec((LAYERS, HIDDEN, 3 * HIDDEN), lambda b: (0, 0, 0)),  # qkv_w
            pl.BlockSpec((LAYERS, 1, 3 * HIDDEN), lambda b: (0, 0, 0)),       # qkv_b
            pl.BlockSpec((LAYERS, HIDDEN, HIDDEN), lambda b: (0, 0, 0)),      # wo
            pl.BlockSpec((LAYERS, 1, HIDDEN), lambda b: (0, 0, 0)),           # bo
            pl.BlockSpec((LAYERS, HIDDEN, INTER), lambda b: (0, 0, 0)),       # w1
            pl.BlockSpec((LAYERS, 1, INTER), lambda b: (0, 0, 0)),            # b1
            pl.BlockSpec((LAYERS, INTER, HIDDEN), lambda b: (0, 0, 0)),       # w2
            pl.BlockSpec((LAYERS, 1, HIDDEN), lambda b: (0, 0, 0)),           # b2
            pl.BlockSpec((LAYERS, 4, HIDDEN), lambda b: (0, 0, 0)),           # ln1/ln2 g,b
            pl.BlockSpec((HIDDEN, HIDDEN), lambda b: (0, 0)),                 # pooler_w
            pl.BlockSpec((1, HIDDEN), lambda b: (0, 0)),                      # pooler_b
            pl.BlockSpec((HIDDEN, CLS_PAD), lambda b: (0, 0)),                # cls_w (padded)
            pl.BlockSpec((1, CLS_PAD), lambda b: (0, 0)),                     # cls_b (padded)
        ],
        out_specs=[
            pl.BlockSpec((1, 1, CLS_PAD), lambda b: (b, 0, 0)),               # logits (lane-dense)
            pl.BlockSpec((1, rows, SEQ), lambda b: (b, 0, 0)),                # attention probs
        ],
        out_shape=(jax.ShapeDtypeStruct((B, 1, CLS_PAD), jnp.float32),
                   jax.ShapeDtypeStruct((B, rows, SEQ), jnp.float32)),
        compiler_params=pltpu.CompilerParams(
            dimension_semantics=("parallel",)),   # batch sharded across TCs on v7x
    )
    return kernel(x_emb, add_mask, p["emb_ln"], p["qkv_w"], p["qkv_b"],
                  p["wo"], p["bo"], p["w1"], p["b1"], p["w2"], p["b2"],
                  p["ln"], p["pooler_w"], p["pooler_b"], p["cls_w"], p["cls_b"])


# ----------------------------- parameters ----------------------------------
def init_params(key):
    keys = iter(jax.random.split(key, 128))

    def w(shape):
        return jax.random.normal(next(keys), shape, jnp.float32) * 0.02

    params = {
        "word_emb": w((VOCAB, HIDDEN)),
        "pos_emb": w((MAX_POS, HIDDEN)),
        "type_emb": w((TYPE_VOCAB, HIDDEN)),
        "emb_ln_g": jnp.ones((HIDDEN,), jnp.float32),
        "emb_ln_b": jnp.zeros((HIDDEN,), jnp.float32),
        "layers": [],
        "pooler_w": w((HIDDEN, HIDDEN)),
        "pooler_b": jnp.zeros((HIDDEN,), jnp.float32),
        "cls_w": w((HIDDEN, NUM_CLASSES)),
        "cls_b": jnp.zeros((NUM_CLASSES,), jnp.float32),
    }
    for _ in range(LAYERS):
        params["layers"].append({
            "wq": w((HIDDEN, HIDDEN)), "bq": jnp.zeros((HIDDEN,), jnp.float32),
            "wk": w((HIDDEN, HIDDEN)), "bk": jnp.zeros((HIDDEN,), jnp.float32),
            "wv": w((HIDDEN, HIDDEN)), "bv": jnp.zeros((HIDDEN,), jnp.float32),
            "wo": w((HIDDEN, HIDDEN)), "bo": jnp.zeros((HIDDEN,), jnp.float32),
            "ln1_g": jnp.ones((HIDDEN,), jnp.float32),
            "ln1_b": jnp.zeros((HIDDEN,), jnp.float32),
            "w1": w((HIDDEN, INTER)), "b1": jnp.zeros((INTER,), jnp.float32),
            "w2": w((INTER, HIDDEN)), "b2": jnp.zeros((HIDDEN,), jnp.float32),
            "ln2_g": jnp.ones((HIDDEN,), jnp.float32),
            "ln2_b": jnp.zeros((HIDDEN,), jnp.float32),
        })
    return params


def pack_params(params):
    """Pack per-layer weights for the fused kernel: QKV concatenated (scale
    folded into Q), layers stacked along a leading axis, matmul weights cast
    to MM_DTYPE, classifier padded to a lane-dense 128-wide output."""
    scale = jnp.float32(1.0 / (HEAD_DIM ** 0.5))
    ls = params["layers"]

    def stk(f):
        return jnp.stack([f(ly) for ly in ls])

    qkv_w = stk(lambda ly: jnp.concatenate(
        [ly["wq"] * scale, ly["wk"], ly["wv"]], axis=1))                 # [L,H,3H]
    qkv_b = stk(lambda ly: jnp.concatenate(
        [ly["bq"] * scale, ly["bk"], ly["bv"]])[None, :])                # [L,1,3H]
    wo = stk(lambda ly: ly["wo"])
    bo = stk(lambda ly: ly["bo"][None, :])
    w1 = stk(lambda ly: ly["w1"])
    b1 = stk(lambda ly: ly["b1"][None, :])
    w2 = stk(lambda ly: ly["w2"])
    b2 = stk(lambda ly: ly["b2"][None, :])
    ln = stk(lambda ly: jnp.stack([ly["ln1_g"], ly["ln1_b"],
                                   ly["ln2_g"], ly["ln2_b"]]))           # [L,4,H]
    cls_w = jnp.zeros((HIDDEN, CLS_PAD), jnp.float32)
    cls_w = cls_w.at[:, :NUM_CLASSES].set(params["cls_w"])
    cls_b = jnp.zeros((CLS_PAD,), jnp.float32)
    cls_b = cls_b.at[:NUM_CLASSES].set(params["cls_b"])[None, :]

    return {
        "word_emb": params["word_emb"],
        "pos_emb": params["pos_emb"],
        "type_emb": params["type_emb"],
        "emb_ln": jnp.stack([params["emb_ln_g"], params["emb_ln_b"]]),   # [2,H]
        "qkv_w": qkv_w.astype(MM_DTYPE), "qkv_b": qkv_b,
        "wo": wo.astype(MM_DTYPE), "bo": bo,
        "w1": w1.astype(MM_DTYPE), "b1": b1,
        "w2": w2.astype(MM_DTYPE), "b2": b2,
        "ln": ln,
        "pooler_w": params["pooler_w"].astype(MM_DTYPE),
        "pooler_b": params["pooler_b"][None, :],
        "cls_w": cls_w.astype(MM_DTYPE), "cls_b": cls_b,
    }


# ----------------------------- model ---------------------------------------
@jax.jit
def bert_classifier_forward(packed, input_ids, token_type_ids, attention_mask):
    B, S = input_ids.shape

    # Embedding gathers are JAX glue; everything else runs in the fused kernel.
    words = jnp.take(packed["word_emb"], input_ids, axis=0)              # [B,S,H]
    pos = packed["pos_emb"][:S][None, :, :]                              # [1,S,H]
    types = jnp.take(packed["type_emb"], token_type_ids, axis=0)         # [B,S,H]
    x_emb = words + pos + types                                          # [B,S,H]

    add_mask = ((1.0 - attention_mask.astype(jnp.float32))
                * -10000.0)[:, None, :]                                  # [B,1,S]

    logits_pad, probs_flat = _fused_forward(x_emb, add_mask, packed)

    logits = logits_pad[:, 0, :NUM_CLASSES]                              # [B,numclasses]
    probs = probs_flat.reshape(B, LAYERS, HEADS, S, S)
    attentions = tuple(probs[:, l] for l in range(LAYERS))               # HF-style per layer
    # self.dropout has p=0.0 -> identity, matching the reference module.
    return logits, attentions


# ----------------------------- main -----------------------------------------
if __name__ == "__main__":
    key = jax.random.PRNGKey(0)
    pkey, ikey = jax.random.split(key)
    params = init_params(pkey)
    packed = pack_params(params)

    input_ids = jax.random.randint(ikey, (BATCH, SEQ), 0, VOCAB, jnp.int32)
    token_type_ids = jnp.zeros((BATCH, SEQ), jnp.int32)
    attention_mask = jnp.ones((BATCH, SEQ), jnp.int32)

    logits, attentions = bert_classifier_forward(
        packed, input_ids, token_type_ids, attention_mask)

    logits = jax.block_until_ready(logits)
    attentions = tuple(jax.block_until_ready(a) for a in attentions)

    assert logits.shape == (BATCH, NUM_CLASSES)
    assert len(attentions) == LAYERS
    assert attentions[0].shape == (BATCH, HEADS, SEQ, SEQ)
    assert bool(jnp.all(jnp.isfinite(logits)))
    assert bool(jnp.all(jnp.isfinite(attentions[0])))
    print("KERNEL_OK")
</pallas_src>

<mosaic_0001>
module attributes {stable_mosaic.version = 11 : i64} {
  func.func @_bert_fused_kernel(%arg0: i32, %arg1: memref<1x8x32xf32, #tpu.memory_space<vmem>>, %arg2: memref<1x1x8xf32, #tpu.memory_space<vmem>>, %arg3: memref<2x32xf32, #tpu.memory_space<vmem>>, %arg4: memref<2x32x96xbf16, #tpu.memory_space<vmem>>, %arg5: memref<2x1x96xf32, #tpu.memory_space<vmem>>, %arg6: memref<2x32x32xbf16, #tpu.memory_space<vmem>>, %arg7: memref<2x1x32xf32, #tpu.memory_space<vmem>>, %arg8: memref<2x32x64xbf16, #tpu.memory_space<vmem>>, %arg9: memref<2x1x64xf32, #tpu.memory_space<vmem>>, %arg10: memref<2x64x32xbf16, #tpu.memory_space<vmem>>, %arg11: memref<2x1x32xf32, #tpu.memory_space<vmem>>, %arg12: memref<2x4x32xf32, #tpu.memory_space<vmem>>, %arg13: memref<32x32xbf16, #tpu.memory_space<vmem>>, %arg14: memref<1x32xf32, #tpu.memory_space<vmem>>, %arg15: memref<32x128xbf16, #tpu.memory_space<vmem>>, %arg16: memref<1x128xf32, #tpu.memory_space<vmem>>, %arg17: memref<1x1x128xf32, #tpu.memory_space<vmem>>, %arg18: memref<1x32x8xf32, #tpu.memory_space<vmem>>) attributes {dimension_semantics = [#tpu.dimension_semantics<parallel>], iteration_bounds = array<i64: 2>, scalar_prefetch = 0 : i64, scratch_operands = 0 : i64, tpu.core_type = #tpu.core_type<tc>, window_params = [{transform_indices = @transform_0, window_bounds = array<i64: 1, 8, 32>}, {transform_indices = @transform_1, window_bounds = array<i64: 1, 1, 8>}, {pipeline_mode = #tpu.pipeline_mode<synchronous>, transform_indices = @transform_2, window_bounds = array<i64: 2, 32>}, {pipeline_mode = #tpu.pipeline_mode<synchronous>, transform_indices = @transform_3, window_bounds = array<i64: 2, 32, 96>}, {pipeline_mode = #tpu.pipeline_mode<synchronous>, transform_indices = @transform_4, window_bounds = array<i64: 2, 1, 96>}, {pipeline_mode = #tpu.pipeline_mode<synchronous>, transform_indices = @transform_5, window_bounds = array<i64: 2, 32, 32>}, {pipeline_mode = #tpu.pipeline_mode<synchronous>, transform_indices = @transform_6, window_bounds = array<i64: 2, 1, 32>}, {pipeline_mode = #tpu.pipeline_mode<synchronous>, transform_indices = @transform_7, window_bounds = array<i64: 2, 32, 64>}, {pipeline_mode = #tpu.pipeline_mode<synchronous>, transform_indices = @transform_8, window_bounds = array<i64: 2, 1, 64>}, {pipeline_mode = #tpu.pipeline_mode<synchronous>, transform_indices = @transform_9, window_bounds = array<i64: 2, 64, 32>}, {pipeline_mode = #tpu.pipeline_mode<synchronous>, transform_indices = @transform_10, window_bounds = array<i64: 2, 1, 32>}, {pipeline_mode = #tpu.pipeline_mode<synchronous>, transform_indices = @transform_11, window_bounds = array<i64: 2, 4, 32>}, {pipeline_mode = #tpu.pipeline_mode<synchronous>, transform_indices = @transform_12, window_bounds = array<i64: 32, 32>}, {pipeline_mode = #tpu.pipeline_mode<synchronous>, transform_indices = @transform_13, window_bounds = array<i64: 1, 32>}, {pipeline_mode = #tpu.pipeline_mode<synchronous>, transform_indices = @transform_14, window_bounds = array<i64: 32, 128>}, {pipeline_mode = #tpu.pipeline_mode<synchronous>, transform_indices = @transform_15, window_bounds = array<i64: 1, 128>}, {transform_indices = @transform_16, window_bounds = array<i64: 1, 1, 128>}, {transform_indices = @transform_17, window_bounds = array<i64: 1, 32, 8>}]} {
    %c0 = arith.constant 0 : index
    %c0_0 = arith.constant 0 : index
    %c0_1 = arith.constant 0 : index
    %0 = vector.load %arg1[%c0, %c0_0, %c0_1] : memref<1x8x32xf32, #tpu.memory_space<vmem>>, vector<1x8x32xf32>
    %1 = vector.shape_cast %0 : vector<1x8x32xf32> to vector<8x32xf32>
    %c0_2 = arith.constant 0 : index
    %c0_3 = arith.constant 0 : index
    %c0_4 = arith.constant 0 : index
    %2 = vector.load %arg2[%c0_2, %c0_3, %c0_4] : memref<1x1x8xf32, #tpu.memory_space<vmem>>, vector<1x1x8xf32>
    %3 = vector.shape_cast %2 : vector<1x1x8xf32> to vector<1x8xf32>
    %c0_5 = arith.constant 0 : index
    %c0_6 = arith.constant 0 : index
    %4 = vector.load %arg3[%c0_5, %c0_6] : memref<2x32xf32, #tpu.memory_space<vmem>>, vector<1x32xf32>
    %c1 = arith.constant 1 : index
    %c0_7 = arith.constant 0 : index
    %5 = vector.load %arg3[%c1, %c0_7] : memref<2x32xf32, #tpu.memory_space<vmem>>, vector<1x32xf32>
    %cst = arith.constant dense<0.000000e+00> : vector<8xf32>
    %6 = vector.multi_reduction <add>, %1, %cst [1] : vector<8x32xf32> to vector<8xf32>
    %7 = vector.shape_cast %6 : vector<8xf32> to vector<8x1xf32>
    %cst_8 = arith.constant 3.200000e+01 : f32
    %8 = vector.broadcast %cst_8 : f32 to vector<8x1xf32>
    %9 = arith.divf %7, %8 : vector<8x1xf32>
    %10 = vector.broadcast %9 : vector<8x1xf32> to vector<8x32xf32>
    %11 = arith.subf %1, %10 : vector<8x32xf32>
    %12 = vector.broadcast %9 : vector<8x1xf32> to vector<8x32xf32>
    %13 = arith.subf %1, %12 : vector<8x32xf32>
    %14 = arith.mulf %11, %13 : vector<8x32xf32>
    %cst_9 = arith.constant dense<0.000000e+00> : vector<8xf32>
    %15 = vector.multi_reduction <add>, %14, %cst_9 [1] : vector<8x32xf32> to vector<8xf32>
    %16 = vector.shape_cast %15 : vector<8xf32> to vector<8x1xf32>
    %cst_10 = arith.constant 3.200000e+01 : f32
    %17 = vector.broadcast %cst_10 : f32 to vector<8x1xf32>
    %18 = arith.divf %16, %17 : vector<8x1xf32>
    %19 = vector.broadcast %9 : vector<8x1xf32> to vector<8x32xf32>
    %20 = arith.subf %1, %19 : vector<8x32xf32>
    %cst_11 = arith.constant 9.99999996E-13 : f32
    %21 = vector.broadcast %cst_11 : f32 to vector<8x1xf32>
    %22 = arith.addf %18, %21 : vector<8x1xf32>
    %23 = math.rsqrt %22 : vector<8x1xf32>
    %24 = vector.broadcast %23 : vector<8x1xf32> to vector<8x32xf32>
    %25 = arith.mulf %20, %24 : vector<8x32xf32>
    %26 = vector.broadcast %4 : vector<1x32xf32> to vector<8x32xf32>
    %27 = arith.mulf %25, %26 : vector<8x32xf32>
    %28 = vector.broadcast %5 : vector<1x32xf32> to vector<8x32xf32>
    %29 = arith.addf %27, %28 : vector<8x32xf32>
    %c0_12 = arith.constant 0 : index
    %c0_13 = arith.constant 0 : index
    %c0_14 = arith.constant 0 : index
    %30 = vector.load %arg4[%c0_12, %c0_13, %c0_14] : memref<2x32x96xbf16, #tpu.memory_space<vmem>>, vector<1x32x96xbf16>
    %31 = vector.shape_cast %30 : vector<1x32x96xbf16> to vector<32x96xbf16>
    %c0_15 = arith.constant 0 : index
    %c0_16 = arith.constant 0 : index
    %c0_17 = arith.constant 0 : index
    %32 = vector.load %arg5[%c0_15, %c0_16, %c0_17] : memref<2x1x96xf32, #tpu.memory_space<vmem>>, vector<1x1x96xf32>
    %33 = vector.shape_cast %32 : vector<1x1x96xf32> to vector<1x96xf32>
    %34 = arith.truncf %29 : vector<8x32xf32> to vector<8x32xbf16>
    %cst_18 = arith.constant dense<0.000000e+00> : vector<8x96xf32>
    %35 = tpu.matmul %34, %31, %cst_18 {dimension_numbers = #tpu.dot_dimension_numbers<[1], [0], [0], [1], [0, 0, 1, 1], [], []>} : vector<8x32xbf16>, vector<32x96xbf16>, vector<8x96xf32> -> vector<8x96xf32>
    %36 = vector.broadcast %33 : vector<1x96xf32> to vector<8x96xf32>
    %37 = arith.addf %35, %36 : vector<8x96xf32>
    %38 = vector.extract_strided_slice %37 {offsets = [0, 0], sizes = [8, 16], strides = [1, 1]} : vector<8x96xf32> to vector<8x16xf32>
    %39 = vector.extract_strided_slice %37 {offsets = [0, 32], sizes = [8, 16], strides = [1, 1]} : vector<8x96xf32> to vector<8x16xf32>
    %40 = vector.extract_strided_slice %37 {offsets = [0, 64], sizes = [8, 16], strides = [1, 1]} : vector<8x96xf32> to vector<8x16xf32>
    %41 = arith.truncf %38 : vector<8x16xf32> to vector<8x16xbf16>
    %42 = arith.truncf %39 : vector<8x16xf32> to vector<8x16xbf16>
    %cst_19 = arith.constant dense<0.000000e+00> : vector<8x8xf32>
    %43 = tpu.matmul %41, %42, %cst_19 {dimension_numbers = #tpu.dot_dimension_numbers<[1], [1], [0], [0], [0, 0, 1, 0], [], []>} : vector<8x16xbf16>, vector<8x16xbf16>, vector<8x8xf32> -> vector<8x8xf32>
    %44 = vector.broadcast %3 : vector<1x8xf32> to vector<8x8xf32>
    %45 = arith.addf %43, %44 : vector<8x8xf32>
    %cst_20 = arith.constant dense<0xFF800000> : vector<8xf32>
    %46 = vector.multi_reduction <maximumf>, %45, %cst_20 [1] : vector<8x8xf32> to vector<8xf32>
    %47 = vector.shape_cast %46 : vector<8xf32> to vector<8x1xf32>
    %48 = vector.broadcast %47 : vector<8x1xf32> to vector<8x8xf32>
    %49 = arith.subf %45, %48 : vector<8x8xf32>
    %50 = math.exp %49 : vector<8x8xf32>
    %cst_21 = arith.constant dense<0.000000e+00> : vector<8xf32>
    %51 = vector.multi_reduction <add>, %50, %cst_21 [1] : vector<8x8xf32> to vector<8xf32>
    %52 = vector.shape_cast %51 : vector<8xf32> to vector<8x1xf32>
    %53 = tpu.reciprocal %52 {approx = true} : vector<8x1xf32> -> vector<8x1xf32>
    %54 = vector.broadcast %53 : vector<8x1xf32> to vector<8x8xf32>
    %55 = arith.mulf %50, %54 : vector<8x8xf32>
    %c0_22 = arith.constant 0 : index
    %c0_23 = arith.constant 0 : index
    %c0_24 = arith.constant 0 : index
    %56 = vector.load %arg18[%c0_22, %c0_23, %c0_24] : memref<1x32x8xf32, #tpu.memory_space<vmem>>, vector<1x8x8xf32>
    %57 = vector.shape_cast %56 : vector<1x8x8xf32> to vector<8x8xf32>
    %58 = vector.shape_cast %55 : vector<8x8xf32> to vector<1x8x8xf32>
    tpu.vector_store %arg18[%c0_22, %c0_23, %c0_24], %58 {strides = array<i32>} : memref<1x32x8xf32, #tpu.memory_space<vmem>>, vector<1x8x8xf32>,
    %59 = arith.truncf %55 : vector<8x8xf32> to vector<8x8xbf16>
    %60 = arith.truncf %40 : vector<8x16xf32> to vector<8x16xbf16>
    %cst_25 = arith.constant dense<0.000000e+00> : vector<8x16xf32>
    %61 = tpu.matmul %59, %60, %cst_25 {dimension_numbers = #tpu.dot_dimension_numbers<[1], [0], [0], [1], [0, 0, 1, 1], [], []>} : vector<8x8xbf16>, vector<8x16xbf16>, vector<8x16xf32> -> vector<8x16xf32>
    %62 = vector.extract_strided_slice %37 {offsets = [0, 16], sizes = [8, 16], strides = [1, 1]} : vector<8x96xf32> to vector<8x16xf32>
    %63 = vector.extract_strided_slice %37 {offsets = [0, 48], sizes = [8, 16], strides = [1, 1]} : vector<8x96xf32> to vector<8x16xf32>
    %64 = vector.extract_strided_slice %37 {offsets = [0, 80], sizes = [8, 16], strides = [1, 1]} : vector<8x96xf32> to vector<8x16xf32>
    %65 = arith.truncf %62 : vector<8x16xf32> to vector<8x16xbf16>
    %66 = arith.truncf %63 : vector<8x16xf32> to vector<8x16xbf16>
    %cst_26 = arith.constant dense<0.000000e+00> : vector<8x8xf32>
    %67 = tpu.matmul %65, %66, %cst_26 {dimension_numbers = #tpu.dot_dimension_numbers<[1], [1], [0], [0], [0, 0, 1, 0], [], []>} : vector<8x16xbf16>, vector<8x16xbf16>, vector<8x8xf32> -> vector<8x8xf32>
    %68 = vector.broadcast %3 : vector<1x8xf32> to vector<8x8xf32>
    %69 = arith.addf %67, %68 : vector<8x8xf32>
    %cst_27 = arith.constant dense<0xFF800000> : vector<8xf32>
    %70 = vector.multi_reduction <maximumf>, %69, %cst_27 [1] : vector<8x8xf32> to vector<8xf32>
    %71 = vector.shape_cast %70 : vector<8xf32> to vector<8x1xf32>
    %72 = vector.broadcast %71 : vector<8x1xf32> to vector<8x8xf32>
    %73 = arith.subf %69, %72 : vector<8x8xf32>
    %74 = math.exp %73 : vector<8x8xf32>
    %cst_28 = arith.constant dense<0.000000e+00> : vector<8xf32>
    %75 = vector.multi_reduction <add>, %74, %cst_28 [1] : vector<8x8xf32> to vector<8xf32>
    %76 = vector.shape_cast %75 : vector<8xf32> to vector<8x1xf32>
    %77 = tpu.reciprocal %76 {approx = true} : vector<8x1xf32> -> vector<8x1xf32>
    %78 = vector.broadcast %77 : vector<8x1xf32> to vector<8x8xf32>
    %79 = arith.mulf %74, %78 : vector<8x8xf32>
    %c0_29 = arith.constant 0 : index
    %c8 = arith.constant 8 : index
    %c0_30 = arith.constant 0 : index
    %80 = vector.load %arg18[%c0_29, %c8, %c0_30] : memref<1x32x8xf32, #tpu.memory_space<vmem>>, vector<1x8x8xf32>
    %81 = vector.shape_cast %80 : vector<1x8x8xf32> to vector<8x8xf32>
    %82 = vector.shape_cast %79 : vector<8x8xf32> to vector<1x8x8xf32>
    tpu.vector_store %arg18[%c0_29, %c8, %c0_30], %82 {strides = array<i32>} : memref<1x32x8xf32, #tpu.memory_space<vmem>>, vector<1x8x8xf32>,
    %83 = arith.truncf %79 : vector<8x8xf32> to vector<8x8xbf16>
    %84 = arith.truncf %64 : vector<8x16xf32> to vector<8x16xbf16>
    %cst_31 = arith.constant dense<0.000000e+00> : vector<8x16xf32>
    %85 = tpu.matmul %83, %84, %cst_31 {dimension_numbers = #tpu.dot_dimension_numbers<[1], [0], [0], [1], [0, 0, 1, 1], [], []>} : vector<8x8xbf16>, vector<8x16xbf16>, vector<8x16xf32> -> vector<8x16xf32>
    %86 = tpu.concatenate %61, %85 in 1 : vector<8x16xf32>, vector<8x16xf32> -> vector<8x32xf32>
    %c0_32 = arith.constant 0 : index
    %c0_33 = arith.constant 0 : index
    %c0_34 = arith.constant 0 : index
    %87 = vector.load %arg6[%c0_32, %c0_33, %c0_34] : memref<2x32x32xbf16, #tpu.memory_space<vmem>>, vector<1x32x32xbf16>
    %88 = vector.shape_cast %87 : vector<1x32x32xbf16> to vector<32x32xbf16>
    %c0_35 = arith.constant 0 : index
    %c0_36 = arith.constant 0 : index
    %c0_37 = arith.constant 0 : index
    %89 = vector.load %arg7[%c0_35, %c0_36, %c0_37] : memref<2x1x32xf32, #tpu.memory_space<vmem>>, vector<1x1x32xf32>
    %90 = vector.shape_cast %89 : vector<1x1x32xf32> to vector<1x32xf32>
    %91 = arith.truncf %86 : vector<8x32xf32> to vector<8x32xbf16>
    %cst_38 = arith.constant dense<0.000000e+00> : vector<8x32xf32>
    %92 = tpu.matmul %91, %88, %cst_38 {dimension_numbers = #tpu.dot_dimension_numbers<[1], [0], [0], [1], [0, 0, 1, 1], [], []>} : vector<8x32xbf16>, vector<32x32xbf16>, vector<8x32xf32> -> vector<8x32xf32>
    %93 = vector.broadcast %90 : vector<1x32xf32> to vector<8x32xf32>
    %94 = arith.addf %92, %93 : vector<8x32xf32>
    %c0_39 = arith.constant 0 : index
    %c0_40 = arith.constant 0 : index
    %c0_41 = arith.constant 0 : index
    %95 = vector.load %arg12[%c0_39, %c0_40, %c0_41] : memref<2x4x32xf32, #tpu.memory_space<vmem>>, vector<1x4x32xf32>
    %96 = vector.shape_cast %95 : vector<1x4x32xf32> to vector<4x32xf32>
    %97 = arith.addf %94, %29 : vector<8x32xf32>
    %98 = vector.extract_strided_slice %96 {offsets = [0, 0], sizes = [1, 32], strides = [1, 1]} : vector<4x32xf32> to vector<1x32xf32>
    %99 = vector.extract_strided_slice %96 {offsets = [1, 0], sizes = [1, 32], strides = [1, 1]} : vector<4x32xf32> to vector<1x32xf32>
    %cst_42 = arith.constant dense<0.000000e+00> : vector<8xf32>
    %100 = vector.multi_reduction <add>, %97, %cst_42 [1] : vector<8x32xf32> to vector<8xf32>
    %101 = vector.shape_cast %100 : vector<8xf32> to vector<8x1xf32>
    %cst_43 = arith.constant 3.200000e+01 : f32
    %102 = vector.broadcast %cst_43 : f32 to vector<8x1xf32>
    %103 = arith.divf %101, %102 : vector<8x1xf32>
    %104 = vector.broadcast %103 : vector<8x1xf32> to vector<8x32xf32>
    %105 = arith.subf %97, %104 : vector<8x32xf32>
    %106 = vector.broadcast %103 : vector<8x1xf32> to vector<8x32xf32>
    %107 = arith.subf %97, %106 : vector<8x32xf32>
    %108 = arith.mulf %105, %107 : vector<8x32xf32>
    %cst_44 = arith.constant dense<0.000000e+00> : vector<8xf32>
    %109 = vector.multi_reduction <add>, %108, %cst_44 [1] : vector<8x32xf32> to vector<8xf32>
    %110 = vector.shape_cast %109 : vector<8xf32> to vector<8x1xf32>
    %cst_45 = arith.constant 3.200000e+01 : f32
    %111 = vector.broadcast %cst_45 : f32 to vector<8x1xf32>
    %112 = arith.divf %110, %111 : vector<8x1xf32>
    %113 = vector.broadcast %103 : vector<8x1xf32> to vector<8x32xf32>
    %114 = arith.subf %97, %113 : vector<8x32xf32>
    %cst_46 = arith.constant 9.99999996E-13 : f32
    %115 = vector.broadcast %cst_46 : f32 to vector<8x1xf32>
    %116 = arith.addf %112, %115 : vector<8x1xf32>
    %117 = math.rsqrt %116 : vector<8x1xf32>
    %118 = vector.broadcast %117 : vector<8x1xf32> to vector<8x32xf32>
    %119 = arith.mulf %114, %118 : vector<8x32xf32>
    %120 = vector.broadcast %98 : vector<1x32xf32> to vector<8x32xf32>
    %121 = arith.mulf %119, %120 : vector<8x32xf32>
    %122 = vector.broadcast %99 : vector<1x32xf32> to vector<8x32xf32>
    %123 = arith.addf %121, %122 : vector<8x32xf32>
    %c0_47 = arith.constant 0 : index
    %c0_48 = arith.constant 0 : index
    %c0_49 = arith.constant 0 : index
    %124 = vector.load %arg8[%c0_47, %c0_48, %c0_49] : memref<2x32x64xbf16, #tpu.memory_space<vmem>>, vector<1x32x64xbf16>
    %125 = vector.shape_cast %124 : vector<1x32x64xbf16> to vector<32x64xbf16>
    %c0_50 = arith.constant 0 : index
    %c0_51 = arith.constant 0 : index
    %c0_52 = arith.constant 0 : index
    %126 = vector.load %arg9[%c0_50, %c0_51, %c0_52] : memref<2x1x64xf32, #tpu.memory_space<vmem>>, vector<1x1x64xf32>
    %127 = vector.shape_cast %126 : vector<1x1x64xf32> to vector<1x64xf32>
    %128 = arith.truncf %123 : vector<8x32xf32> to vector<8x32xbf16>
    %cst_53 = arith.constant dense<0.000000e+00> : vector<8x64xf32>
    %129 = tpu.matmul %128, %125, %cst_53 {dimension_numbers = #tpu.dot_dimension_numbers<[1], [0], [0], [1], [0, 0, 1, 1], [], []>} : vector<8x32xbf16>, vector<32x64xbf16>, vector<8x64xf32> -> vector<8x64xf32>
    %130 = vector.broadcast %127 : vector<1x64xf32> to vector<8x64xf32>
    %131 = arith.addf %129, %130 : vector<8x64xf32>
    %cst_54 = arith.constant 5.000000e-01 : f32
    %132 = vector.broadcast %cst_54 : f32 to vector<8x64xf32>
    %133 = arith.mulf %132, %131 : vector<8x64xf32>
    %cst_55 = arith.constant 4.471500e-02 : f32
    %134 = vector.broadcast %cst_55 : f32 to vector<8x64xf32>
    %135 = arith.mulf %134, %131 : vector<8x64xf32>
    %136 = arith.mulf %135, %131 : vector<8x64xf32>
    %137 = arith.mulf %136, %131 : vector<8x64xf32>
    %138 = arith.addf %131, %137 : vector<8x64xf32>
    %cst_56 = arith.constant 0.797884583 : f32
    %139 = vector.broadcast %cst_56 : f32 to vector<8x64xf32>
    %140 = arith.mulf %139, %138 : vector<8x64xf32>
    %141 = math.tanh %140 : vector<8x64xf32>
    %cst_57 = arith.constant 1.000000e+00 : f32
    %142 = vector.broadcast %cst_57 : f32 to vector<8x64xf32>
    %143 = arith.addf %142, %141 : vector<8x64xf32>
    %144 = arith.mulf %133, %143 : vector<8x64xf32>
    %c0_58 = arith.constant 0 : index
    %c0_59 = arith.constant 0 : index
    %c0_60 = arith.constant 0 : index
    %145 = vector.load %arg10[%c0_58, %c0_59, %c0_60] : memref<2x64x32xbf16, #tpu.memory_space<vmem>>, vector<1x64x32xbf16>
    %146 = vector.shape_cast %145 : vector<1x64x32xbf16> to vector<64x32xbf16>
    %c0_61 = arith.constant 0 : index
    %c0_62 = arith.constant 0 : index
    %c0_63 = arith.constant 0 : index
    %147 = vector.load %arg11[%c0_61, %c0_62, %c0_63] : memref<2x1x32xf32, #tpu.memory_space<vmem>>, vector<1x1x32xf32>
    %148 = vector.shape_cast %147 : vector<1x1x32xf32> to vector<1x32xf32>
    %149 = arith.truncf %144 : vector<8x64xf32> to vector<8x64xbf16>
    %cst_64 = arith.constant dense<0.000000e+00> : vector<8x32xf32>
    %150 = tpu.matmul %149, %146, %cst_64 {dimension_numbers = #tpu.dot_dimension_numbers<[1], [0], [0], [1], [0, 0, 1, 1], [], []>} : vector<8x64xbf16>, vector<64x32xbf16>, vector<8x32xf32> -> vector<8x32xf32>
    %151 = vector.broadcast %148 : vector<1x32xf32> to vector<8x32xf32>
    %152 = arith.addf %150, %151 : vector<8x32xf32>
    %153 = arith.addf %152, %123 : vector<8x32xf32>
    %154 = vector.extract_strided_slice %96 {offsets = [2, 0], sizes = [1, 32], strides = [1, 1]} : vector<4x32xf32> to vector<1x32xf32>
    %155 = vector.extract_strided_slice %96 {offsets = [3, 0], sizes = [1, 32], strides = [1, 1]} : vector<4x32xf32> to vector<1x32xf32>
    %cst_65 = arith.constant dense<0.000000e+00> : vector<8xf32>
    %156 = vector.multi_reduction <add>, %153, %cst_65 [1] : vector<8x32xf32> to vector<8xf32>
    %157 = vector.shape_cast %156 : vector<8xf32> to vector<8x1xf32>
    %cst_66 = arith.constant 3.200000e+01 : f32
    %158 = vector.broadcast %cst_66 : f32 to vector<8x1xf32>
    %159 = arith.divf %157, %158 : vector<8x1xf32>
    %160 = vector.broadcast %159 : vector<8x1xf32> to vector<8x32xf32>
    %161 = arith.subf %153, %160 : vector<8x32xf32>
    %162 = vector.broadcast %159 : vector<8x1xf32> to vector<8x32xf32>
    %163 = arith.subf %153, %162 : vector<8x32xf32>
    %164 = arith.mulf %161, %163 : vector<8x32xf32>
    %cst_67 = arith.constant dense<0.000000e+00> : vector<8xf32>
    %165 = vector.multi_reduction <add>, %164, %cst_67 [1] : vector<8x32xf32> to vector<8xf32>
    %166 = vector.shape_cast %165 : vector<8xf32> to vector<8x1xf32>
    %cst_68 = arith.constant 3.200000e+01 : f32
    %167 = vector.broadcast %cst_68 : f32 to vector<8x1xf32>
    %168 = arith.divf %166, %167 : vector<8x1xf32>
    %169 = vector.broadcast %159 : vector<8x1xf32> to vector<8x32xf32>
    %170 = arith.subf %153, %169 : vector<8x32xf32>
    %cst_69 = arith.constant 9.99999996E-13 : f32
    %171 = vector.broadcast %cst_69 : f32 to vector<8x1xf32>
    %172 = arith.addf %168, %171 : vector<8x1xf32>
    %173 = math.rsqrt %172 : vector<8x1xf32>
    %174 = vector.broadcast %173 : vector<8x1xf32> to vector<8x32xf32>
    %175 = arith.mulf %170, %174 : vector<8x32xf32>
    %176 = vector.broadcast %154 : vector<1x32xf32> to vector<8x32xf32>
    %177 = arith.mulf %175, %176 : vector<8x32xf32>
    %178 = vector.broadcast %155 : vector<1x32xf32> to vector<8x32xf32>
    %179 = arith.addf %177, %178 : vector<8x32xf32>
    %c1_70 = arith.constant 1 : index
    %c0_71 = arith.constant 0 : index
    %c0_72 = arith.constant 0 : index
    %180 = vector.load %arg4[%c1_70, %c0_71, %c0_72] : memref<2x32x96xbf16, #tpu.memory_space<vmem>>, vector<1x32x96xbf16>
    %181 = vector.shape_cast %180 : vector<1x32x96xbf16> to vector<32x96xbf16>
    %c1_73 = arith.constant 1 : index
    %c0_74 = arith.constant 0 : index
    %c0_75 = arith.constant 0 : index
    %182 = vector.load %arg5[%c1_73, %c0_74, %c0_75] : memref<2x1x96xf32, #tpu.memory_space<vmem>>, vector<1x1x96xf32>
    %183 = vector.shape_cast %182 : vector<1x1x96xf32> to vector<1x96xf32>
    %184 = arith.truncf %179 : vector<8x32xf32> to vector<8x32xbf16>
    %cst_76 = arith.constant dense<0.000000e+00> : vector<8x96xf32>
    %185 = tpu.matmul %184, %181, %cst_76 {dimension_numbers = #tpu.dot_dimension_numbers<[1], [0], [0], [1], [0, 0, 1, 1], [], []>} : vector<8x32xbf16>, vector<32x96xbf16>, vector<8x96xf32> -> vector<8x96xf32>
    %186 = vector.broadcast %183 : vector<1x96xf32> to vector<8x96xf32>
    %187 = arith.addf %185, %186 : vector<8x96xf32>
    %188 = vector.extract_strided_slice %187 {offsets = [0, 0], sizes = [8, 16], strides = [1, 1]} : vector<8x96xf32> to vector<8x16xf32>
    %189 = vector.extract_strided_slice %187 {offsets = [0, 32], sizes = [8, 16], strides = [1, 1]} : vector<8x96xf32> to vector<8x16xf32>
    %190 = vector.extract_strided_slice %187 {offsets = [0, 64], sizes = [8, 16], strides = [1, 1]} : vector<8x96xf32> to vector<8x16xf32>
    %191 = arith.truncf %188 : vector<8x16xf32> to vector<8x16xbf16>
    %192 = arith.truncf %189 : vector<8x16xf32> to vector<8x16xbf16>
    %cst_77 = arith.constant dense<0.000000e+00> : vector<8x8xf32>
    %193 = tpu.matmul %191, %192, %cst_77 {dimension_numbers = #tpu.dot_dimension_numbers<[1], [1], [0], [0], [0, 0, 1, 0], [], []>} : vector<8x16xbf16>, vector<8x16xbf16>, vector<8x8xf32> -> vector<8x8xf32>
    %194 = vector.broadcast %3 : vector<1x8xf32> to vector<8x8xf32>
    %195 = arith.addf %193, %194 : vector<8x8xf32>
    %cst_78 = arith.constant dense<0xFF800000> : vector<8xf32>
    %196 = vector.multi_reduction <maximumf>, %195, %cst_78 [1] : vector<8x8xf32> to vector<8xf32>
    %197 = vector.shape_cast %196 : vector<8xf32> to vector<8x1xf32>
    %198 = vector.broadcast %197 : vector<8x1xf32> to vector<8x8xf32>
    %199 = arith.subf %195, %198 : vector<8x8xf32>
    %200 = math.exp %199 : vector<8x8xf32>
    %cst_79 = arith.constant dense<0.000000e+00> : vector<8xf32>
    %201 = vector.multi_reduction <add>, %200, %cst_79 [1] : vector<8x8xf32> to vector<8xf32>
    %202 = vector.shape_cast %201 : vector<8xf32> to vector<8x1xf32>
    %203 = tpu.reciprocal %202 {approx = true} : vector<8x1xf32> -> vector<8x1xf32>
    %204 = vector.broadcast %203 : vector<8x1xf32> to vector<8x8xf32>
    %205 = arith.mulf %200, %204 : vector<8x8xf32>
    %c0_80 = arith.constant 0 : index
    %c16 = arith.constant 16 : index
    %c0_81 = arith.constant 0 : index
    %206 = vector.load %arg18[%c0_80, %c16, %c0_81] : memref<1x32x8xf32, #tpu.memory_space<vmem>>, vector<1x8x8xf32>
    %207 = vector.shape_cast %206 : vector<1x8x8xf32> to vector<8x8xf32>
    %208 = vector.shape_cast %205 : vector<8x8xf32> to vector<1x8x8xf32>
    tpu.vector_store %arg18[%c0_80, %c16, %c0_81], %208 {strides = array<i32>} : memref<1x32x8xf32, #tpu.memory_space<vmem>>, vector<1x8x8xf32>,
    %209 = arith.truncf %205 : vector<8x8xf32> to vector<8x8xbf16>
    %210 = arith.truncf %190 : vector<8x16xf32> to vector<8x16xbf16>
    %cst_82 = arith.constant dense<0.000000e+00> : vector<8x16xf32>
    %211 = tpu.matmul %209, %210, %cst_82 {dimension_numbers = #tpu.dot_dimension_numbers<[1], [0], [0], [1], [0, 0, 1, 1], [], []>} : vector<8x8xbf16>, vector<8x16xbf16>, vector<8x16xf32> -> vector<8x16xf32>
    %212 = vector.extract_strided_slice %187 {offsets = [0, 16], sizes = [8, 16], strides = [1, 1]} : vector<8x96xf32> to vector<8x16xf32>
    %213 = vector.extract_strided_slice %187 {offsets = [0, 48], sizes = [8, 16], strides = [1, 1]} : vector<8x96xf32> to vector<8x16xf32>
    %214 = vector.extract_strided_slice %187 {offsets = [0, 80], sizes = [8, 16], strides = [1, 1]} : vector<8x96xf32> to vector<8x16xf32>
    %215 = arith.truncf %212 : vector<8x16xf32> to vector<8x16xbf16>
    %216 = arith.truncf %213 : vector<8x16xf32> to vector<8x16xbf16>
    %cst_83 = arith.constant dense<0.000000e+00> : vector<8x8xf32>
    %217 = tpu.matmul %215, %216, %cst_83 {dimension_numbers = #tpu.dot_dimension_numbers<[1], [1], [0], [0], [0, 0, 1, 0], [], []>} : vector<8x16xbf16>, vector<8x16xbf16>, vector<8x8xf32> -> vector<8x8xf32>
    %218 = vector.broadcast %3 : vector<1x8xf32> to vector<8x8xf32>
    %219 = arith.addf %217, %218 : vector<8x8xf32>
    %cst_84 = arith.constant dense<0xFF800000> : vector<8xf32>
    %220 = vector.multi_reduction <maximumf>, %219, %cst_84 [1] : vector<8x8xf32> to vector<8xf32>
    %221 = vector.shape_cast %220 : vector<8xf32> to vector<8x1xf32>
    %222 = vector.broadcast %221 : vector<8x1xf32> to vector<8x8xf32>
    %223 = arith.subf %219, %222 : vector<8x8xf32>
    %224 = math.exp %223 : vector<8x8xf32>
    %cst_85 = arith.constant dense<0.000000e+00> : vector<8xf32>
    %225 = vector.multi_reduction <add>, %224, %cst_85 [1] : vector<8x8xf32> to vector<8xf32>
    %226 = vector.shape_cast %225 : vector<8xf32> to vector<8x1xf32>
    %227 = tpu.reciprocal %226 {approx = true} : vector<8x1xf32> -> vector<8x1xf32>
    %228 = vector.broadcast %227 : vector<8x1xf32> to vector<8x8xf32>
    %229 = arith.mulf %224, %228 : vector<8x8xf32>
    %c0_86 = arith.constant 0 : index
    %c24 = arith.constant 24 : index
    %c0_87 = arith.constant 0 : index
    %230 = vector.load %arg18[%c0_86, %c24, %c0_87] : memref<1x32x8xf32, #tpu.memory_space<vmem>>, vector<1x8x8xf32>
    %231 = vector.shape_cast %230 : vector<1x8x8xf32> to vector<8x8xf32>
    %232 = vector.shape_cast %229 : vector<8x8xf32> to vector<1x8x8xf32>
    tpu.vector_store %arg18[%c0_86, %c24, %c0_87], %232 {strides = array<i32>} : memref<1x32x8xf32, #tpu.memory_space<vmem>>, vector<1x8x8xf32>,
    %233 = arith.truncf %229 : vector<8x8xf32> to vector<8x8xbf16>
    %234 = arith.truncf %214 : vector<8x16xf32> to vector<8x16xbf16>
    %cst_88 = arith.constant dense<0.000000e+00> : vector<8x16xf32>
    %235 = tpu.matmul %233, %234, %cst_88 {dimension_numbers = #tpu.dot_dimension_numbers<[1], [0], [0], [1], [0, 0, 1, 1], [], []>} : vector<8x8xbf16>, vector<8x16xbf16>, vector<8x16xf32> -> vector<8x16xf32>
    %236 = tpu.concatenate %211, %235 in 1 : vector<8x16xf32>, vector<8x16xf32> -> vector<8x32xf32>
    %c1_89 = arith.constant 1 : index
    %c0_90 = arith.constant 0 : index
    %c0_91 = arith.constant 0 : index
    %237 = vector.load %arg6[%c1_89, %c0_90, %c0_91] : memref<2x32x32xbf16, #tpu.memory_space<vmem>>, vector<1x32x32xbf16>
    %238 = vector.shape_cast %237 : vector<1x32x32xbf16> to vector<32x32xbf16>
    %c1_92 = arith.constant 1 : index
    %c0_93 = arith.constant 0 : index
    %c0_94 = arith.constant 0 : index
    %239 = vector.load %arg7[%c1_92, %c0_93, %c0_94] : memref<2x1x32xf32, #tpu.memory_space<vmem>>, vector<1x1x32xf32>
    %240 = vector.shape_cast %239 : vector<1x1x32xf32> to vector<1x32xf32>
    %241 = arith.truncf %236 : vector<8x32xf32> to vector<8x32xbf16>
    %cst_95 = arith.constant dense<0.000000e+00> : vector<8x32xf32>
    %242 = tpu.matmul %241, %238, %cst_95 {dimension_numbers = #tpu.dot_dimension_numbers<[1], [0], [0], [1], [0, 0, 1, 1], [], []>} : vector<8x32xbf16>, vector<32x32xbf16>, vector<8x32xf32> -> vector<8x32xf32>
    %243 = vector.broadcast %240 : vector<1x32xf32> to vector<8x32xf32>
    %244 = arith.addf %242, %243 : vector<8x32xf32>
    %c1_96 = arith.constant 1 : index
    %c0_97 = arith.constant 0 : index
    %c0_98 = arith.constant 0 : index
    %245 = vector.load %arg12[%c1_96, %c0_97, %c0_98] : memref<2x4x32xf32, #tpu.memory_space<vmem>>, vector<1x4x32xf32>
    %246 = vector.shape_cast %245 : vector<1x4x32xf32> to vector<4x32xf32>
    %247 = arith.addf %244, %179 : vector<8x32xf32>
    %248 = vector.extract_strided_slice %246 {offsets = [0, 0], sizes = [1, 32], strides = [1, 1]} : vector<4x32xf32> to vector<1x32xf32>
    %249 = vector.extract_strided_slice %246 {offsets = [1, 0], sizes = [1, 32], strides = [1, 1]} : vector<4x32xf32> to vector<1x32xf32>
    %cst_99 = arith.constant dense<0.000000e+00> : vector<8xf32>
    %250 = vector.multi_reduction <add>, %247, %cst_99 [1] : vector<8x32xf32> to vector<8xf32>
    %251 = vector.shape_cast %250 : vector<8xf32> to vector<8x1xf32>
    %cst_100 = arith.constant 3.200000e+01 : f32
    %252 = vector.broadcast %cst_100 : f32 to vector<8x1xf32>
    %253 = arith.divf %251, %252 : vector<8x1xf32>
    %254 = vector.broadcast %253 : vector<8x1xf32> to vector<8x32xf32>
    %255 = arith.subf %247, %254 : vector<8x32xf32>
    %256 = vector.broadcast %253 : vector<8x1xf32> to vector<8x32xf32>
    %257 = arith.subf %247, %256 : vector<8x32xf32>
    %258 = arith.mulf %255, %257 : vector<8x32xf32>
    %cst_101 = arith.constant dense<0.000000e+00> : vector<8xf32>
    %259 = vector.multi_reduction <add>, %258, %cst_101 [1] : vector<8x32xf32> to vector<8xf32>
    %260 = vector.shape_cast %259 : vector<8xf32> to vector<8x1xf32>
    %cst_102 = arith.constant 3.200000e+01 : f32
    %261 = vector.broadcast %cst_102 : f32 to vector<8x1xf32>
    %262 = arith.divf %260, %261 : vector<8x1xf32>
    %263 = vector.broadcast %253 : vector<8x1xf32> to vector<8x32xf32>
    %264 = arith.subf %247, %263 : vector<8x32xf32>
    %cst_103 = arith.constant 9.99999996E-13 : f32
    %265 = vector.broadcast %cst_103 : f32 to vector<8x1xf32>
    %266 = arith.addf %262, %265 : vector<8x1xf32>
    %267 = math.rsqrt %266 : vector<8x1xf32>
    %268 = vector.broadcast %267 : vector<8x1xf32> to vector<8x32xf32>
    %269 = arith.mulf %264, %268 : vector<8x32xf32>
    %270 = vector.broadcast %248 : vector<1x32xf32> to vector<8x32xf32>
    %271 = arith.mulf %269, %270 : vector<8x32xf32>
    %272 = vector.broadcast %249 : vector<1x32xf32> to vector<8x32xf32>
    %273 = arith.addf %271, %272 : vector<8x32xf32>
    %c1_104 = arith.constant 1 : index
    %c0_105 = arith.constant 0 : index
    %c0_106 = arith.constant 0 : index
    %274 = vector.load %arg8[%c1_104, %c0_105, %c0_106] : memref<2x32x64xbf16, #tpu.memory_space<vmem>>, vector<1x32x64xbf16>
    %275 = vector.shape_cast %274 : vector<1x32x64xbf16> to vector<32x64xbf16>
    %c1_107 = arith.constant 1 : index
    %c0_108 = arith.constant 0 : index
    %c0_109 = arith.constant 0 : index
    %276 = vector.load %arg9[%c1_107, %c0_108, %c0_109] : memref<2x1x64xf32, #tpu.memory_space<vmem>>, vector<1x1x64xf32>
    %277 = vector.shape_cast %276 : vector<1x1x64xf32> to vector<1x64xf32>
    %278 = arith.truncf %273 : vector<8x32xf32> to vector<8x32xbf16>
    %cst_110 = arith.constant dense<0.000000e+00> : vector<8x64xf32>
    %279 = tpu.matmul %278, %275, %cst_110 {dimension_numbers = #tpu.dot_dimension_numbers<[1], [0], [0], [1], [0, 0, 1, 1], [], []>} : vector<8x32xbf16>, vector<32x64xbf16>, vector<8x64xf32> -> vector<8x64xf32>
    %280 = vector.broadcast %277 : vector<1x64xf32> to vector<8x64xf32>
    %281 = arith.addf %279, %280 : vector<8x64xf32>
    %cst_111 = arith.constant 5.000000e-01 : f32
    %282 = vector.broadcast %cst_111 : f32 to vector<8x64xf32>
    %283 = arith.mulf %282, %281 : vector<8x64xf32>
    %cst_112 = arith.constant 4.471500e-02 : f32
    %284 = vector.broadcast %cst_112 : f32 to vector<8x64xf32>
    %285 = arith.mulf %284, %281 : vector<8x64xf32>
    %286 = arith.mulf %285, %281 : vector<8x64xf32>
    %287 = arith.mulf %286, %281 : vector<8x64xf32>
    %288 = arith.addf %281, %287 : vector<8x64xf32>
    %cst_113 = arith.constant 0.797884583 : f32
    %289 = vector.broadcast %cst_113 : f32 to vector<8x64xf32>
    %290 = arith.mulf %289, %288 : vector<8x64xf32>
    %291 = math.tanh %290 : vector<8x64xf32>
    %cst_114 = arith.constant 1.000000e+00 : f32
    %292 = vector.broadcast %cst_114 : f32 to vector<8x64xf32>
    %293 = arith.addf %292, %291 : vector<8x64xf32>
    %294 = arith.mulf %283, %293 : vector<8x64xf32>
    %c1_115 = arith.constant 1 : index
    %c0_116 = arith.constant 0 : index
    %c0_117 = arith.constant 0 : index
    %295 = vector.load %arg10[%c1_115, %c0_116, %c0_117] : memref<2x64x32xbf16, #tpu.memory_space<vmem>>, vector<1x64x32xbf16>
    %296 = vector.shape_cast %295 : vector<1x64x32xbf16> to vector<64x32xbf16>
    %c1_118 = arith.constant 1 : index
    %c0_119 = arith.constant 0 : index
    %c0_120 = arith.constant 0 : index
    %297 = vector.load %arg11[%c1_118, %c0_119, %c0_120] : memref<2x1x32xf32, #tpu.memory_space<vmem>>, vector<1x1x32xf32>
    %298 = vector.shape_cast %297 : vector<1x1x32xf32> to vector<1x32xf32>
    %299 = arith.truncf %294 : vector<8x64xf32> to vector<8x64xbf16>
    %cst_121 = arith.constant dense<0.000000e+00> : vector<8x32xf32>
    %300 = tpu.matmul %299, %296, %cst_121 {dimension_numbers = #tpu.dot_dimension_numbers<[1], [0], [0], [1], [0, 0, 1, 1], [], []>} : vector<8x64xbf16>, vector<64x32xbf16>, vector<8x32xf32> -> vector<8x32xf32>
    %301 = vector.broadcast %298 : vector<1x32xf32> to vector<8x32xf32>
    %302 = arith.addf %300, %301 : vector<8x32xf32>
    %303 = arith.addf %302, %273 : vector<8x32xf32>
    %304 = vector.extract_strided_slice %246 {offsets = [2, 0], sizes = [1, 32], strides = [1, 1]} : vector<4x32xf32> to vector<1x32xf32>
    %305 = vector.extract_strided_slice %246 {offsets = [3, 0], sizes = [1, 32], strides = [1, 1]} : vector<4x32xf32> to vector<1x32xf32>
    %cst_122 = arith.constant dense<0.000000e+00> : vector<8xf32>
    %306 = vector.multi_reduction <add>, %303, %cst_122 [1] : vector<8x32xf32> to vector<8xf32>
    %307 = vector.shape_cast %306 : vector<8xf32> to vector<8x1xf32>
    %cst_123 = arith.constant 3.200000e+01 : f32
    %308 = vector.broadcast %cst_123 : f32 to vector<8x1xf32>
    %309 = arith.divf %307, %308 : vector<8x1xf32>
    %310 = vector.broadcast %309 : vector<8x1xf32> to vector<8x32xf32>
    %311 = arith.subf %303, %310 : vector<8x32xf32>
    %312 = vector.broadcast %309 : vector<8x1xf32> to vector<8x32xf32>
    %313 = arith.subf %303, %312 : vector<8x32xf32>
    %314 = arith.mulf %311, %313 : vector<8x32xf32>
    %cst_124 = arith.constant dense<0.000000e+00> : vector<8xf32>
    %315 = vector.multi_reduction <add>, %314, %cst_124 [1] : vector<8x32xf32> to vector<8xf32>
    %316 = vector.shape_cast %315 : vector<8xf32> to vector<8x1xf32>
    %cst_125 = arith.constant 3.200000e+01 : f32
    %317 = vector.broadcast %cst_125 : f32 to vector<8x1xf32>
    %318 = arith.divf %316, %317 : vector<8x1xf32>
    %319 = vector.broadcast %309 : vector<8x1xf32> to vector<8x32xf32>
    %320 = arith.subf %303, %319 : vector<8x32xf32>
    %cst_126 = arith.constant 9.99999996E-13 : f32
    %321 = vector.broadcast %cst_126 : f32 to vector<8x1xf32>
    %322 = arith.addf %318, %321 : vector<8x1xf32>
    %323 = math.rsqrt %322 : vector<8x1xf32>
    %324 = vector.broadcast %323 : vector<8x1xf32> to vector<8x32xf32>
    %325 = arith.mulf %320, %324 : vector<8x32xf32>
    %326 = vector.broadcast %304 : vector<1x32xf32> to vector<8x32xf32>
    %327 = arith.mulf %325, %326 : vector<8x32xf32>
    %328 = vector.broadcast %305 : vector<1x32xf32> to vector<8x32xf32>
    %329 = arith.addf %327, %328 : vector<8x32xf32>
    %330 = vector.extract_strided_slice %329 {offsets = [0, 0], sizes = [1, 32], strides = [1, 1]} : vector<8x32xf32> to vector<1x32xf32>
    %c0_127 = arith.constant 0 : index
    %c0_128 = arith.constant 0 : index
    %331 = vector.load %arg13[%c0_127, %c0_128] : memref<32x32xbf16, #tpu.memory_space<vmem>>, vector<32x32xbf16>
    %c0_129 = arith.constant 0 : index
    %c0_130 = arith.constant 0 : index
    %332 = vector.load %arg14[%c0_129, %c0_130] : memref<1x32xf32, #tpu.memory_space<vmem>>, vector<1x32xf32>
    %333 = arith.truncf %330 : vector<1x32xf32> to vector<1x32xbf16>
    %cst_131 = arith.constant dense<0.000000e+00> : vector<1x32xf32>
    %334 = tpu.matmul %333, %331, %cst_131 {dimension_numbers = #tpu.dot_dimension_numbers<[1], [0], [0], [1], [0, 0, 1, 1], [], []>} : vector<1x32xbf16>, vector<32x32xbf16>, vector<1x32xf32> -> vector<1x32xf32>
    %335 = arith.addf %334, %332 : vector<1x32xf32>
    %336 = math.tanh %335 : vector<1x32xf32>
    %c0_132 = arith.constant 0 : index
    %c0_133 = arith.constant 0 : index
    %337 = vector.load %arg15[%c0_132, %c0_133] : memref<32x128xbf16, #tpu.memory_space<vmem>>, vector<32x128xbf16>
    %c0_134 = arith.constant 0 : index
    %c0_135 = arith.constant 0 : index
    %338 = vector.load %arg16[%c0_134, %c0_135] : memref<1x128xf32, #tpu.memory_space<vmem>>, vector<1x128xf32>
    %339 = arith.truncf %336 : vector<1x32xf32> to vector<1x32xbf16>
    %cst_136 = arith.constant dense<0.000000e+00> : vector<1x128xf32>
    %340 = tpu.matmul %339, %337, %cst_136 {dimension_numbers = #tpu.dot_dimension_numbers<[1], [0], [0], [1], [0, 0, 1, 1], [], []>} : vector<1x32xbf16>, vector<32x128xbf16>, vector<1x128xf32> -> vector<1x128xf32>
    %341 = arith.addf %340, %338 : vector<1x128xf32>
    %c0_137 = arith.constant 0 : index
    %c0_138 = arith.constant 0 : index
    %c0_139 = arith.constant 0 : index
    %342 = vector.load %arg17[%c0_137, %c0_138, %c0_139] : memref<1x1x128xf32, #tpu.memory_space<vmem>>, vector<1x1x128xf32>
    %343 = vector.shape_cast %342 : vector<1x1x128xf32> to vector<1x128xf32>
    %344 = vector.shape_cast %341 : vector<1x128xf32> to vector<1x1x128xf32>
    tpu.vector_store %arg17[%c0_137, %c0_138, %c0_139], %344 {strides = array<i32>} : memref<1x1x128xf32, #tpu.memory_space<vmem>>, vector<1x1x128xf32>,
    return
  }
  func.func @transform_0(%arg0: i32) -> (i32, i32, i32) {
    %c0_i32 = arith.constant 0 : i32
    %c0_i32_0 = arith.constant 0 : i32
    %c0_i32_1 = arith.constant 0 : i32
    return %arg0, %c0_i32, %c0_i32_0 : i32, i32, i32
  }
  func.func @transform_1(%arg0: i32) -> (i32, i32, i32) {
    %c0_i32 = arith.constant 0 : i32
    %c0_i32_0 = arith.constant 0 : i32
    %c0_i32_1 = arith.constant 0 : i32
    return %arg0, %c0_i32, %c0_i32_0 : i32, i32, i32
  }
  func.func @transform_2(%arg0: i32) -> (i32, i32) {
    %c0_i32 = arith.constant 0 : i32
    %c0_i32_0 = arith.constant 0 : i32
    %c0_i32_1 = arith.constant 0 : i32
    return %c0_i32, %c0_i32_0 : i32, i32
  }
  func.func @transform_3(%arg0: i32) -> (i32, i32, i32) {
    %c0_i32 = arith.constant 0 : i32
    %c0_i32_0 = arith.constant 0 : i32
    %c0_i32_1 = arith.constant 0 : i32
    %c0_i32_2 = arith.constant 0 : i32
    return %c0_i32, %c0_i32_0, %c0_i32_1 : i32, i32, i32
  }
  func.func @transform_4(%arg0: i32) -> (i32, i32, i32) {
    %c0_i32 = arith.constant 0 : i32
    %c0_i32_0 = arith.constant 0 : i32
    %c0_i32_1 = arith.constant 0 : i32
    %c0_i32_2 = arith.constant 0 : i32
    return %c0_i32, %c0_i32_0, %c0_i32_1 : i32, i32, i32
  }
  func.func @transform_5(%arg0: i32) -> (i32, i32, i32) {
    %c0_i32 = arith.constant 0 : i32
    %c0_i32_0 = arith.constant 0 : i32
    %c0_i32_1 = arith.constant 0 : i32
    %c0_i32_2 = arith.constant 0 : i32
    return %c0_i32, %c0_i32_0, %c0_i32_1 : i32, i32, i32
  }
  func.func @transform_6(%arg0: i32) -> (i32, i32, i32) {
    %c0_i32 = arith.constant 0 : i32
    %c0_i32_0 = arith.constant 0 : i32
    %c0_i32_1 = arith.constant 0 : i32
    %c0_i32_2 = arith.constant 0 : i32
    return %c0_i32, %c0_i32_0, %c0_i32_1 : i32, i32, i32
  }
  func.func @transform_7(%arg0: i32) -> (i32, i32, i32) {
    %c0_i32 = arith.constant 0 : i32
    %c0_i32_0 = arith.constant 0 : i32
    %c0_i32_1 = arith.constant 0 : i32
    %c0_i32_2 = arith.constant 0 : i32
    return %c0_i32, %c0_i32_0, %c0_i32_1 : i32, i32, i32
  }
  func.func @transform_8(%arg0: i32) -> (i32, i32, i32) {
    %c0_i32 = arith.constant 0 : i32
    %c0_i32_0 = arith.constant 0 : i32
    %c0_i32_1 = arith.constant 0 : i32
    %c0_i32_2 = arith.constant 0 : i32
    return %c0_i32, %c0_i32_0, %c0_i32_1 : i32, i32, i32
  }
  func.func @transform_9(%arg0: i32) -> (i32, i32, i32) {
    %c0_i32 = arith.constant 0 : i32
    %c0_i32_0 = arith.constant 0 : i32
    %c0_i32_1 = arith.constant 0 : i32
    %c0_i32_2 = arith.constant 0 : i32
    return %c0_i32, %c0_i32_0, %c0_i32_1 : i32, i32, i32
  }
  func.func @transform_10(%arg0: i32) -> (i32, i32, i32) {
    %c0_i32 = arith.constant 0 : i32
    %c0_i32_0 = arith.constant 0 : i32
    %c0_i32_1 = arith.constant 0 : i32
    %c0_i32_2 = arith.constant 0 : i32
    return %c0_i32, %c0_i32_0, %c0_i32_1 : i32, i32, i32
  }
  func.func @transform_11(%arg0: i32) -> (i32, i32, i32) {
    %c0_i32 = arith.constant 0 : i32
    %c0_i32_0 = arith.constant 0 : i32
    %c0_i32_1 = arith.constant 0 : i32
    %c0_i32_2 = arith.constant 0 : i32
    return %c0_i32, %c0_i32_0, %c0_i32_1 : i32, i32, i32
  }
  func.func @transform_12(%arg0: i32) -> (i32, i32) {
    %c0_i32 = arith.constant 0 : i32
    %c0_i32_0 = arith.constant 0 : i32
    %c0_i32_1 = arith.constant 0 : i32
    return %c0_i32, %c0_i32_0 : i32, i32
  }
  func.func @transform_13(%arg0: i32) -> (i32, i32) {
    %c0_i32 = arith.constant 0 : i32
    %c0_i32_0 = arith.constant 0 : i32
    %c0_i32_1 = arith.constant 0 : i32
    return %c0_i32, %c0_i32_0 : i32, i32
  }
  func.func @transform_14(%arg0: i32) -> (i32, i32) {
    %c0_i32 = arith.constant 0 : i32
    %c0_i32_0 = arith.constant 0 : i32
    %c0_i32_1 = arith.constant 0 : i32
    return %c0_i32, %c0_i32_0 : i32, i32
  }
  func.func @transform_15(%arg0: i32) -> (i32, i32) {
    %c0_i32 = arith.constant 0 : i32
    %c0_i32_0 = arith.constant 0 : i32
    %c0_i32_1 = arith.constant 0 : i32
    return %c0_i32, %c0_i32_0 : i32, i32
  }
  func.func @transform_16(%arg0: i32) -> (i32, i32, i32) {
    %c0_i32 = arith.constant 0 : i32
    %c0_i32_0 = arith.constant 0 : i32
    %c0_i32_1 = arith.constant 0 : i32
    return %arg0, %c0_i32, %c0_i32_0 : i32, i32, i32
  }
  func.func @transform_17(%arg0: i32) -> (i32, i32, i32) {
    %c0_i32 = arith.constant 0 : i32
    %c0_i32_0 = arith.constant 0 : i32
    %c0_i32_1 = arith.constant 0 : i32
    return %arg0, %c0_i32, %c0_i32_0 : i32, i32, i32
  }
}

</mosaic_0001>

<llo_original>
// kernel: bert_classifier_forward.1
$region0: #{bert_classifier_forward.1}
  #allocation0 [shape = 'u32[]', space=smem, size = 0x4, offset = 0x4, fixed_abs, tag = 'smem constant byte address 0x4 - core index']
  #allocation1 [shape = 'u32[144,128]{1,0:T(1,128)}', space=vmem, size = 0x12000, scoped, tag = 'internal scratch']
  %s0 = inlined_call_operand.vmem [shape: f32[2,8,32], index: 0, kind: input, shape index: {}]
  %s1 = inlined_call_operand.vmem [shape: f32[2,1,8], index: 1, kind: input, shape index: {}]
  %s2 = inlined_call_operand.vmem [shape: f32[2,32], index: 2, kind: input, shape index: {}]
  %s3 = inlined_call_operand.vmem [shape: bf16[2,32,96], index: 3, kind: input, shape index: {}]
  %s4 = inlined_call_operand.vmem [shape: f32[2,1,96], index: 4, kind: input, shape index: {}]
  %s5 = inlined_call_operand.vmem [shape: bf16[2,32,32], index: 5, kind: input, shape index: {}]
  %s6 = inlined_call_operand.vmem [shape: f32[2,1,32], index: 6, kind: input, shape index: {}]
  %s7 = inlined_call_operand.vmem [shape: bf16[2,32,64], index: 7, kind: input, shape index: {}]
  %s8 = inlined_call_operand.vmem [shape: f32[2,1,64], index: 8, kind: input, shape index: {}]
  %s9 = inlined_call_operand.vmem [shape: bf16[2,64,32], index: 9, kind: input, shape index: {}]
  %s10 = inlined_call_operand.vmem [shape: f32[2,1,32], index: 10, kind: input, shape index: {}]
  %s11 = inlined_call_operand.vmem [shape: f32[2,4,32], index: 11, kind: input, shape index: {}]
  %s12 = inlined_call_operand.vmem [shape: bf16[32,32], index: 12, kind: input, shape index: {}]
  %s13 = inlined_call_operand.vmem [shape: f32[1,32], index: 13, kind: input, shape index: {}]
  %s14 = inlined_call_operand.vmem [shape: bf16[32,128], index: 14, kind: input, shape index: {}]
  %s15 = inlined_call_operand.vmem [shape: f32[1,128], index: 15, kind: input, shape index: {}]
  %s16 = inlined_call_operand.hbm [shape: f32[2,1,128], index: 16, kind: output, shape index: {0}]
  %s17 = inlined_call_operand.vmem [shape: f32[2,32,8], index: 17, kind: output, shape index: {1}]
  %18 = xla_tuple %s16, %s17
  %s19 = sld [smem:[#allocation0]]
  $region105: #{bert_classifier_forward.1} parent=0
    _
  %s21 = ssub.s32 1, %s19
  %s22 = scalar_select 0, %s21, %s19
  $region1: #{bert_classifier_forward.1} parent=0
    #allocation2 [shape = 'u8[1024]{0}', space=vmem, size = 0x400, scoped, tag = 'output window, operand 0']
    #allocation3 [shape = 's32[2]{0}', space=sflag, size = 0x8, scoped, tag = 'scoped memory for bert_classifier_forward.1']
    %23 = vsyncpa [#allocation3], 0
    %s24 = scalar_lea.sflag [#allocation3], 1
    %25 = vsyncpa %s24, 0
    loop: start=0, step=1, limit=4
    $region2: #{bert_classifier_forward.1} parent=1 // loop_pre_header
      _
    $region3: #{bert_classifier_forward.1} parent=1 // loop_header
      %s27 = sphi 0, %s31
      %p28 = scmp.ge.s32.totalorder %s27, 4
      %s37 = sphi 0, %s39
      %s40 = sphi 0, %s37
      %s41 = sphi 0, %s40
      %s57 = sphi 0, %s41
      %s63 = sphi 0, %s65
      %s66 = sphi 0, %s63
      %s67 = sphi 0, %s66
      %s83 = sphi 0, %s67
      %s87 = sphi 0, %s87
      %s89 = sphi 0, %s87
      %s90 = sphi 0, %s89
      %s104 = sphi 0, %s90
      %s108 = sphi 0, %s108
      %s110 = sphi 0, %s108
      %s111 = sphi 0, %s110
      %s125 = sphi 0, %s111
      %s129 = sphi 0, %s129
      %s131 = sphi 0, %s129
      %s132 = sphi 0, %s131
      %s146 = sphi 0, %s132
      %s150 = sphi 0, %s150
      %s152 = sphi 0, %s150
      %s153 = sphi 0, %s152
      %s167 = sphi 0, %s153
      %s171 = sphi 0, %s171
      %s173 = sphi 0, %s171
      %s174 = sphi 0, %s173
      %s188 = sphi 0, %s174
      %s192 = sphi 0, %s192
      %s194 = sphi 0, %s192
      %s195 = sphi 0, %s194
      %s209 = sphi 0, %s195
      %s213 = sphi 0, %s213
      %s215 = sphi 0, %s213
      %s216 = sphi 0, %s215
      %s230 = sphi 0, %s216
      %s234 = sphi 0, %s234
      %s236 = sphi 0, %s234
      %s237 = sphi 0, %s236
      %s251 = sphi 0, %s237
      %s255 = sphi 0, %s255
      %s257 = sphi 0, %s255
      %s258 = sphi 0, %s257
      %s272 = sphi 0, %s258
      %s276 = sphi 0, %s276
      %s278 = sphi 0, %s276
      %s279 = sphi 0, %s278
      %s293 = sphi 0, %s279
      %s297 = sphi 0, %s297
      %s299 = sphi 0, %s297
      %s300 = sphi 0, %s299
      %s314 = sphi 0, %s300
      %s318 = sphi 0, %s318
      %s320 = sphi 0, %s318
      %s321 = sphi 0, %s320
      %s335 = sphi 0, %s321
      %s339 = sphi 0, %s339
      %s341 = sphi 0, %s339
      %s342 = sphi 0, %s341
      %s356 = sphi 0, %s342
      %s360 = sphi 0, %s360
      %s362 = sphi 0, %s360
      %s363 = sphi 0, %s362
      %s377 = sphi 0, %s363
      %s383 = sphi 0, %s385
      %s386 = sphi 0, %s383
      %s387 = sphi 0, %s386
      %s403 = sphi 0, %s387
      %s409 = sphi 0, %s411
      %s412 = sphi 0, %s409
      %s413 = sphi 0, %s412
      %s429 = sphi 0, %s413
    $region4: #{bert_classifier_forward.1} parent=1 // loop_header_branch
      %30 = sbr.rel (%p28) target = $region8
    $region5: #{bert_classifier_forward.1} parent=1 // loop_body
      %s32 = ssub.s32 %s27, 1
      %s33 = ssub.s32 %s27, 2
      %s34 = sadd.s32 %s27, 1
      %s35 = ssub.s32 %s27, %s34
      %p36 = scmp.eq.s32.totalorder %s35, 0
      %s38 = sadd.s32 %s37, 1
      %s39 = scalar_select %p36, %s37, %s38
      %p42 = pneg %p36
      %p43 = scmp.eq.s32.totalorder %s27, 1
      %p44 = por %p42, %p43
      %p45 = scmp.ne.s32.totalorder %s37, %s40
      %p46 = scmp.eq.s32.totalorder %s27, 0
      %p47 = por %p45, %p46
      %p48 = scmp.ne.s32.totalorder %s37, %s40
      %p49 = scmp.eq.s32.totalorder %s32, 1
      %p50 = por %p48, %p49
      %p51 = scmp.ne.s32.totalorder %s40, %s41
      %p52 = scmp.eq.s32.totalorder %s32, 0
      %p53 = por %p51, %p52
      %p54 = scmp.ne.s32.totalorder %s40, %s41
      %p55 = scmp.eq.s32.totalorder %s33, 1
      %p56 = por %p54, %p55
      %p58 = scmp.ne.s32.totalorder %s41, %s57
      %p59 = scmp.eq.s32.totalorder %s33, 0
      %p60 = por %p58, %p59
      %s61 = ssub.s32 %s27, %s34
      %p62 = scmp.eq.s32.totalorder %s61, 0
      %s64 = sadd.s32 %s63, 1
      %s65 = scalar_select %p62, %s63, %s64
      %p68 = pneg %p62
      %p69 = scmp.eq.s32.totalorder %s27, 1
      %p70 = por %p68, %p69
      %p71 = scmp.ne.s32.totalorder %s63, %s66
      %p72 = scmp.eq.s32.totalorder %s27, 0
      %p73 = por %p71, %p72
      %p74 = scmp.ne.s32.totalorder %s63, %s66
      %p75 = scmp.eq.s32.totalorder %s32, 1
      %p76 = por %p74, %p75
      %p77 = scmp.ne.s32.totalorder %s66, %s67
      %p78 = scmp.eq.s32.totalorder %s32, 0
      %p79 = por %p77, %p78
      %p80 = scmp.ne.s32.totalorder %s66, %s67
      %p81 = scmp.eq.s32.totalorder %s33, 1
      %p82 = por %p80, %p81
      %p84 = scmp.ne.s32.totalorder %s67, %s83
      %p85 = scmp.eq.s32.totalorder %s33, 0
      %p86 = por %p84, %p85
      %s88 = sadd.s32 %s87, 1
      %p91 = scmp.eq.s32.totalorder %s27, 1
      %p92 = scmp.ne.s32.totalorder %s87, %s89
      %p93 = scmp.eq.s32.totalorder %s27, 0
      %p94 = por %p92, %p93
      %p95 = scmp.ne.s32.totalorder %s87, %s89
      %p96 = scmp.eq.s32.totalorder %s32, 1
      %p97 = por %p95, %p96
      %p98 = scmp.ne.s32.totalorder %s89, %s90
      %p99 = scmp.eq.s32.totalorder %s32, 0
      %p100 = por %p98, %p99
      %p101 = scmp.ne.s32.totalorder %s89, %s90
      %p102 = scmp.eq.s32.totalorder %s33, 1
      %p103 = por %p101, %p102
      %p105 = scmp.ne.s32.totalorder %s90, %s104
      %p106 = scmp.eq.s32.totalorder %s33, 0
      %p107 = por %p105, %p106
      %s109 = sadd.s32 %s108, 1
      %p112 = scmp.eq.s32.totalorder %s27, 1
      %p113 = scmp.ne.s32.totalorder %s108, %s110
      %p114 = scmp.eq.s32.totalorder %s27, 0
      %p115 = por %p113, %p114
      %p116 = scmp.ne.s32.totalorder %s108, %s110
      %p117 = scmp.eq.s32.totalorder %s32, 1
      %p118 = por %p116, %p117
      %p119 = scmp.ne.s32.totalorder %s110, %s111
      %p120 = scmp.eq.s32.totalorder %s32, 0
      %p121 = por %p119, %p120
      %p122 = scmp.ne.s32.totalorder %s110, %s111
      %p123 = scmp.eq.s32.totalorder %s33, 1
      %p124 = por %p122, %p123
      %p126 = scmp.ne.s32.totalorder %s111, %s125
      %p127 = scmp.eq.s32.totalorder %s33, 0
      %p128 = por %p126, %p127
      %s130 = sadd.s32 %s129, 1
      %p133 = scmp.eq.s32.totalorder %s27, 1
      %p134 = scmp.ne.s32.totalorder %s129, %s131
      %p135 = scmp.eq.s32.totalorder %s27, 0
      %p136 = por %p134, %p135
      %p137 = scmp.ne.s32.totalorder %s129, %s131
      %p138 = scmp.eq.s32.totalorder %s32, 1
      %p139 = por %p137, %p138
      %p140 = scmp.ne.s32.totalorder %s131, %s132
      %p141 = scmp.eq.s32.totalorder %s32, 0
      %p142 = por %p140, %p141
      %p143 = scmp.ne.s32.totalorder %s131, %s132
      %p144 = scmp.eq.s32.totalorder %s33, 1
      %p145 = por %p143, %p144
      %p147 = scmp.ne.s32.totalorder %s132, %s146
      %p148 = scmp.eq.s32.totalorder %s33, 0
      %p149 = por %p147, %p148
      %s151 = sadd.s32 %s150, 1
      %p154 = scmp.eq.s32.totalorder %s27, 1
      %p155 = scmp.ne.s32.totalorder %s150, %s152
      %p156 = scmp.eq.s32.totalorder %s27, 0
      %p157 = por %p155, %p156
      %p158 = scmp.ne.s32.totalorder %s150, %s152
      %p159 = scmp.eq.s32.totalorder %s32, 1
      %p160 = por %p158, %p159
      %p161 = scmp.ne.s32.totalorder %s152, %s153
      %p162 = scmp.eq.s32.totalorder %s32, 0
      %p163 = por %p161, %p162
      %p164 = scmp.ne.s32.totalorder %s152, %s153
      %p165 = scmp.eq.s32.totalorder %s33, 1
      %p166 = por %p164, %p165
      %p168 = scmp.ne.s32.totalorder %s153, %s167
      %p169 = scmp.eq.s32.totalorder %s33, 0
      %p170 = por %p168, %p169
      %s172 = sadd.s32 %s171, 1
      %p175 = scmp.eq.s32.totalorder %s27, 1
      %p176 = scmp.ne.s32.totalorder %s171, %s173
      %p177 = scmp.eq.s32.totalorder %s27, 0
      %p178 = por %p176, %p177
      %p179 = scmp.ne.s32.totalorder %s171, %s173
      %p180 = scmp.eq.s32.totalorder %s32, 1
      %p181 = por %p179, %p180
      %p182 = scmp.ne.s32.totalorder %s173, %s174
      %p183 = scmp.eq.s32.totalorder %s32, 0
      %p184 = por %p182, %p183
      %p185 = scmp.ne.s32.totalorder %s173, %s174
      %p186 = scmp.eq.s32.totalorder %s33, 1
      %p187 = por %p185, %p186
      %p189 = scmp.ne.s32.totalorder %s174, %s188
      %p190 = scmp.eq.s32.totalorder %s33, 0
      %p191 = por %p189, %p190
      %s193 = sadd.s32 %s192, 1
      %p196 = scmp.eq.s32.totalorder %s27, 1
      %p197 = scmp.ne.s32.totalorder %s192, %s194
      %p198 = scmp.eq.s32.totalorder %s27, 0
      %p199 = por %p197, %p198
      %p200 = scmp.ne.s32.totalorder %s192, %s194
      %p201 = scmp.eq.s32.totalorder %s32, 1
      %p202 = por %p200, %p201
      %p203 = scmp.ne.s32.totalorder %s194, %s195
      %p204 = scmp.eq.s32.totalorder %s32, 0
      %p205 = por %p203, %p204
      %p206 = scmp.ne.s32.totalorder %s194, %s195
      %p207 = scmp.eq.s32.totalorder %s33, 1
      %p208 = por %p206, %p207
      %p210 = scmp.ne.s32.totalorder %s195, %s209
      %p211 = scmp.eq.s32.totalorder %s33, 0
      %p212 = por %p210, %p211
      %s214 = sadd.s32 %s213, 1
      %p217 = scmp.eq.s32.totalorder %s27, 1
      %p218 = scmp.ne.s32.totalorder %s213, %s215
      %p219 = scmp.eq.s32.totalorder %s27, 0
      %p220 = por %p218, %p219
      %p221 = scmp.ne.s32.totalorder %s213, %s215
      %p222 = scmp.eq.s32.totalorder %s32, 1
      %p223 = por %p221, %p222
      %p224 = scmp.ne.s32.totalorder %s215, %s216
      %p225 = scmp.eq.s32.totalorder %s32, 0
      %p226 = por %p224, %p225
      %p227 = scmp.ne.s32.totalorder %s215, %s216
      %p228 = scmp.eq.s32.totalorder %s33, 1
      %p229 = por %p227, %p228
      %p231 = scmp.ne.s32.totalorder %s216, %s230
      %p232 = scmp.eq.s32.totalorder %s33, 0
      %p233 = por %p231, %p232
      %s235 = sadd.s32 %s234, 1
      %p238 = scmp.eq.s32.totalorder %s27, 1
      %p239 = scmp.ne.s32.totalorder %s234, %s236
      %p240 = scmp.eq.s32.totalorder %s27, 0
      %p241 = por %p239, %p240
      %p242 = scmp.ne.s32.totalorder %s234, %s236
      %p243 = scmp.eq.s32.totalorder %s32, 1
      %p244 = por %p242, %p243
      %p245 = scmp.ne.s32.totalorder %s236, %s237
      %p246 = scmp.eq.s32.totalorder %s32, 0
      %p247 = por %p245, %p246
      %p248 = scmp.ne.s32.totalorder %s236, %s237
      %p249 = scmp.eq.s32.totalorder %s33, 1
      %p250 = por %p248, %p249
      %p252 = scmp.ne.s32.totalorder %s237, %s251
      %p253 = scmp.eq.s32.totalorder %s33, 0
      %p254 = por %p252, %p253
      %s256 = sadd.s32 %s255, 1
      %p259 = scmp.eq.s32.totalorder %s27, 1
      %p260 = scmp.ne.s32.totalorder %s255, %s257
      %p261 = scmp.eq.s32.totalorder %s27, 0
      %p262 = por %p260, %p261
      %p263 = scmp.ne.s32.totalorder %s255, %s257
      %p264 = scmp.eq.s32.totalorder %s32, 1
      %p265 = por %p263, %p264
      %p266 = scmp.ne.s32.totalorder %s257, %s258
      %p267 = scmp.eq.s32.totalorder %s32, 0
      %p268 = por %p266, %p267
      %p269 = scmp.ne.s32.totalorder %s257, %s258
      %p270 = scmp.eq.s32.totalorder %s33, 1
      %p271 = por %p269, %p270
      %p273 = scmp.ne.s32.totalorder %s258, %s272
      %p274 = scmp.eq.s32.totalorder %s33, 0
      %p275 = por %p273, %p274
      %s277 = sadd.s32 %s276, 1
      %p280 = scmp.eq.s32.totalorder %s27, 1
      %p281 = scmp.ne.s32.totalorder %s276, %s278
      %p282 = scmp.eq.s32.totalorder %s27, 0
      %p283 = por %p281, %p282
      %p284 = scmp.ne.s32.totalorder %s276, %s278
      %p285 = scmp.eq.s32.totalorder %s32, 1
      %p286 = por %p284, %p285
      %p287 = scmp.ne.s32.totalorder %s278, %s279
      %p288 = scmp.eq.s32.totalorder %s32, 0
      %p289 = por %p287, %p288
      %p290 = scmp.ne.s32.totalorder %s278, %s279
      %p291 = scmp.eq.s32.totalorder %s33, 1
      %p292 = por %p290, %p291
      %p294 = scmp.ne.s32.totalorder %s279, %s293
      %p295 = scmp.eq.s32.totalorder %s33, 0
      %p296 = por %p294, %p295
      %s298 = sadd.s32 %s297, 1
      %p301 = scmp.eq.s32.totalorder %s27, 1
      %p302 = scmp.ne.s32.totalorder %s297, %s299
      %p303 = scmp.eq.s32.totalorder %s27, 0
      %p304 = por %p302, %p303
      %p305 = scmp.ne.s32.totalorder %s297, %s299
      %p306 = scmp.eq.s32.totalorder %s32, 1
      %p307 = por %p305, %p306
      %p308 = scmp.ne.s32.totalorder %s299, %s300
      %p309 = scmp.eq.s32.totalorder %s32, 0
      %p310 = por %p308, %p309
      %p311 = scmp.ne.s32.totalorder %s299, %s300
      %p312 = scmp.eq.s32.totalorder %s33, 1
      %p313 = por %p311, %p312
      %p315 = scmp.ne.s32.totalorder %s300, %s314
      %p316 = scmp.eq.s32.totalorder %s33, 0
      %p317 = por %p315, %p316
      %s319 = sadd.s32 %s318, 1
      %p322 = scmp.eq.s32.totalorder %s27, 1
      %p323 = scmp.ne.s32.totalorder %s318, %s320
      %p324 = scmp.eq.s32.totalorder %s27, 0
      %p325 = por %p323, %p324
      %p326 = scmp.ne.s32.totalorder %s318, %s320
      %p327 = scmp.eq.s32.totalorder %s32, 1
      %p328 = por %p326, %p327
      %p329 = scmp.ne.s32.totalorder %s320, %s321
      %p330 = scmp.eq.s32.totalorder %s32, 0
      %p331 = por %p329, %p330
      %p332 = scmp.ne.s32.totalorder %s320, %s321
      %p333 = scmp.eq.s32.totalorder %s33, 1
      %p334 = por %p332, %p333
      %p336 = scmp.ne.s32.totalorder %s321, %s335
      %p337 = scmp.eq.s32.totalorder %s33, 0
      %p338 = por %p336, %p337
      %s340 = sadd.s32 %s339, 1
      %p343 = scmp.eq.s32.totalorder %s27, 1
      %p344 = scmp.ne.s32.totalorder %s339, %s341
      %p345 = scmp.eq.s32.totalorder %s27, 0
      %p346 = por %p344, %p345
      %p347 = scmp.ne.s32.totalorder %s339, %s341
      %p348 = scmp.eq.s32.totalorder %s32, 1
      %p349 = por %p347, %p348
      %p350 = scmp.ne.s32.totalorder %s341, %s342
      %p351 = scmp.eq.s32.totalorder %s32, 0
      %p352 = por %p350, %p351
      %p353 = scmp.ne.s32.totalorder %s341, %s342
      %p354 = scmp.eq.s32.totalorder %s33, 1
      %p355 = por %p353, %p354
      %p357 = scmp.ne.s32.totalorder %s342, %s356
      %p358 = scmp.eq.s32.totalorder %s33, 0
      %p359 = por %p357, %p358
      %s361 = sadd.s32 %s360, 1
      %p364 = scmp.eq.s32.totalorder %s27, 1
      %p365 = scmp.ne.s32.totalorder %s360, %s362
      %p366 = scmp.eq.s32.totalorder %s27, 0
      %p367 = por %p365, %p366
      %p368 = scmp.ne.s32.totalorder %s360, %s362
      %p369 = scmp.eq.s32.totalorder %s32, 1
      %p370 = por %p368, %p369
      %p371 = scmp.ne.s32.totalorder %s362, %s363
      %p372 = scmp.eq.s32.totalorder %s32, 0
      %p373 = por %p371, %p372
      %p374 = scmp.ne.s32.totalorder %s362, %s363
      %p375 = scmp.eq.s32.totalorder %s33, 1
      %p376 = por %p374, %p375
      %p378 = scmp.ne.s32.totalorder %s363, %s377
      %p379 = scmp.eq.s32.totalorder %s33, 0
      %p380 = por %p378, %p379
      %s381 = ssub.s32 %s27, %s34
      %p382 = scmp.eq.s32.totalorder %s381, 0
      %s384 = sadd.s32 %s383, 1
      %s385 = scalar_select %p382, %s383, %s384
      %p388 = pneg %p382
      %p389 = scmp.eq.s32.totalorder %s27, 1
      %p390 = por %p388, %p389
      %p391 = scmp.ne.s32.totalorder %s383, %s386
      %p392 = scmp.eq.s32.totalorder %s27, 0
      %p393 = por %p391, %p392
      %p394 = scmp.ne.s32.totalorder %s383, %s386
      %p395 = scmp.eq.s32.totalorder %s32, 1
      %p396 = por %p394, %p395
      %p397 = scmp.ne.s32.totalorder %s386, %s387
      %p398 = scmp.eq.s32.totalorder %s32, 0
      %p399 = por %p397, %p398
      %p400 = scmp.ne.s32.totalorder %s386, %s387
      %p401 = scmp.eq.s32.totalorder %s33, 1
      %p402 = por %p400, %p401
      %p404 = scmp.ne.s32.totalorder %s387, %s403
      %p405 = scmp.eq.s32.totalorder %s33, 0
      %p406 = por %p404, %p405
      %s407 = ssub.s32 %s27, %s34
      %p408 = scmp.eq.s32.totalorder %s407, 0
      %s410 = sadd.s32 %s409, 1
      %s411 = scalar_select %p408, %s409, %s410
      %p414 = pneg %p408
      %p415 = scmp.eq.s32.totalorder %s27, 1
      %p416 = por %p414, %p415
      %p417 = scmp.ne.s32.totalorder %s409, %s412
      %p418 = scmp.eq.s32.totalorder %s27, 0
      %p419 = por %p417, %p418
      %p420 = scmp.ne.s32.totalorder %s409, %s412
      %p421 = scmp.eq.s32.totalorder %s32, 1
      %p422 = por %p420, %p421
      %p423 = scmp.ne.s32.totalorder %s412, %s413
      %p424 = scmp.eq.s32.totalorder %s32, 0
      %p425 = por %p423, %p424
      %p426 = scmp.ne.s32.totalorder %s412, %s413
      %p427 = scmp.eq.s32.totalorder %s33, 1
      %p428 = por %p426, %p427
      %p430 = scmp.ne.s32.totalorder %s413, %s429
      %p431 = scmp.eq.s32.totalorder %s33, 0
      %p432 = por %p430, %p431
      %p433 = scmp.le.s32.totalorder 1, %s27
      %p434 = scmp.lt.s32.totalorder %s27, 3
      %p435 = pnand %p433, %p434
      %p436 = pneg %p435
      // Predicated region
      $region9: #{bert_classifier_forward.1} parent=5 // pred_check
        _
      $region10: #{bert_classifier_forward.1} parent=5 // pred_check_branch
        %438 = sbr.rel (%p435) target = $region12
      $region11: #{bert_classifier_forward.1} parent=5 // pred_region
        %s439 = ssub.s32 %s27, 1
        // Predicated region
        $region13: #{bert_classifier_forward.1} parent=11 // pred_check
          %p440 = pneg %p100
        $region14: #{bert_classifier_forward.1} parent=11 // pred_check_branch
          %442 = sbr.rel (%p440) target = $region16
        $region15: #{bert_classifier_forward.1} parent=11 // pred_region
          _
        $region16: #{bert_classifier_forward.1} parent=11 // pred_fallthru
          _
        // Predicated region
        $region17: #{bert_classifier_forward.1} parent=11 // pred_check
          %p443 = pneg %p121
        $region18: #{bert_classifier_forward.1} parent=11 // pred_check_branch
          %445 = sbr.rel (%p443) target = $region20
        $region19: #{bert_classifier_forward.1} parent=11 // pred_region
          _
        $region20: #{bert_classifier_forward.1} parent=11 // pred_fallthru
          _
        // Predicated region
        $region21: #{bert_classifier_forward.1} parent=11 // pred_check
          %p446 = pneg %p142
        $region22: #{bert_classifier_forward.1} parent=11 // pred_check_branch
          %448 = sbr.rel (%p446) target = $region24
        $region23: #{bert_classifier_forward.1} parent=11 // pred_region
          _
        $region24: #{bert_classifier_forward.1} parent=11 // pred_fallthru
          _
        // Predicated region
        $region25: #{bert_classifier_forward.1} parent=11 // pred_check
          %p449 = pneg %p163
        $region26: #{bert_classifier_forward.1} parent=11 // pred_check_branch
          %451 = sbr.rel (%p449) target = $region28
        $region27: #{bert_classifier_forward.1} parent=11 // pred_region
          _
        $region28: #{bert_classifier_forward.1} parent=11 // pred_fallthru
          _
        // Predicated region
        $region29: #{bert_classifier_forward.1} parent=11 // pred_check
          %p452 = pneg %p184
        $region30: #{bert_classifier_forward.1} parent=11 // pred_check_branch
          %454 = sbr.rel (%p452) target = $region32
        $region31: #{bert_classifier_forward.1} parent=11 // pred_region
          _
        $region32: #{bert_classifier_forward.1} parent=11 // pred_fallthru
          _
        // Predicated region
        $region33: #{bert_classifier_forward.1} parent=11 // pred_check
          %p455 = pneg %p205
        $region34: #{bert_classifier_forward.1} parent=11 // pred_check_branch
          %457 = sbr.rel (%p455) target = $region36
        $region35: #{bert_classifier_forward.1} parent=11 // pred_region
          _
        $region36: #{bert_classifier_forward.1} parent=11 // pred_fallthru
          _
        // Predicated region
        $region37: #{bert_classifier_forward.1} parent=11 // pred_check
          %p458 = pneg %p226
        $region38: #{bert_classifier_forward.1} parent=11 // pred_check_branch
          %460 = sbr.rel (%p458) target = $region40
        $region39: #{bert_classifier_forward.1} parent=11 // pred_region
          _
        $region40: #{bert_classifier_forward.1} parent=11 // pred_fallthru
          _
        // Predicated region
        $region41: #{bert_classifier_forward.1} parent=11 // pred_check
          %p461 = pneg %p247
        $region42: #{bert_classifier_forward.1} parent=11 // pred_check_branch
          %463 = sbr.rel (%p461) target = $region44
        $region43: #{bert_classifier_forward.1} parent=11 // pred_region
          _
        $region44: #{bert_classifier_forward.1} parent=11 // pred_fallthru
          _
        // Predicated region
        $region45: #{bert_classifier_forward.1} parent=11 // pred_check
          %p464 = pneg %p268
        $region46: #{bert_classifier_forward.1} parent=11 // pred_check_branch
          %466 = sbr.rel (%p464) target = $region48
        $region47: #{bert_classifier_forward.1} parent=11 // pred_region
          _
        $region48: #{bert_classifier_forward.1} parent=11 // pred_fallthru
          _
        // Predicated region
        $region49: #{bert_classifier_forward.1} parent=11 // pred_check
          %p467 = pneg %p289
        $region50: #{bert_classifier_forward.1} parent=11 // pred_check_branch
          %469 = sbr.rel (%p467) target = $region52
        $region51: #{bert_classifier_forward.1} parent=11 // pred_region
          _
        $region52: #{bert_classifier_forward.1} parent=11 // pred_fallthru
          _
        // Predicated region
        $region53: #{bert_classifier_forward.1} parent=11 // pred_check
          %p470 = pneg %p310
        $region54: #{bert_classifier_forward.1} parent=11 // pred_check_branch
          %472 = sbr.rel (%p470) target = $region56
        $region55: #{bert_classifier_forward.1} parent=11 // pred_region
          _
        $region56: #{bert_classifier_forward.1} parent=11 // pred_fallthru
          _
        // Predicated region
        $region57: #{bert_classifier_forward.1} parent=11 // pred_check
          %p473 = pneg %p331
        $region58: #{bert_classifier_forward.1} parent=11 // pred_check_branch
          %475 = sbr.rel (%p473) target = $region60
        $region59: #{bert_classifier_forward.1} parent=11 // pred_region
          _
        $region60: #{bert_classifier_forward.1} parent=11 // pred_fallthru
          _
        // Predicated region
        $region61: #{bert_classifier_forward.1} parent=11 // pred_check
          %p476 = pneg %p352
        $region62: #{bert_classifier_forward.1} parent=11 // pred_check_branch
          %478 = sbr.rel (%p476) target = $region64
        $region63: #{bert_classifier_forward.1} parent=11 // pred_region
          _
        $region64: #{bert_classifier_forward.1} parent=11 // pred_fallthru
          _
        // Predicated region
        $region65: #{bert_classifier_forward.1} parent=11 // pred_check
          %p479 = pneg %p373
        $region66: #{bert_classifier_forward.1} parent=11 // pred_check_branch
          %481 = sbr.rel (%p479) target = $region68
        $region67: #{bert_classifier_forward.1} parent=11 // pred_region
          _
        $region68: #{bert_classifier_forward.1} parent=11 // pred_fallthru
          _
      $region12: #{bert_classifier_forward.1} parent=5 // pred_fallthru
        _
      %p482 = scmp.lt.s32.totalorder %s27, 2
      // Predicated region
      $region69: #{bert_classifier_forward.1} parent=5 // pred_check
        %p483 = pneg %p482
      $region70: #{bert_classifier_forward.1} parent=5 // pred_check_branch
        %485 = sbr.rel (%p483) target = $region72
      $region71: #{bert_classifier_forward.1} parent=5 // pred_region
        // Predicated region
        $region73: #{bert_classifier_forward.1} parent=71 // pred_check
          %p486 = pneg %p47
        $region74: #{bert_classifier_forward.1} parent=71 // pred_check_branch
          %488 = sbr.rel (%p486) target = $region76
        $region75: #{bert_classifier_forward.1} parent=71 // pred_region
          %p489 = scmp.lt.s32.totalorder %s27, 1
          %s490 = scalar_select %p489, %s27, 1
          %s491 = smul.addr %s490, 8
          %s492 = scalar_lea.vmem %s0, %s491
        $region76: #{bert_classifier_forward.1} parent=71 // pred_fallthru
          _
        // Predicated region
        $region77: #{bert_classifier_forward.1} parent=71 // pred_check
          %p493 = pneg %p73
        $region78: #{bert_classifier_forward.1} parent=71 // pred_check_branch
          %495 = sbr.rel (%p493) target = $region80
        $region79: #{bert_classifier_forward.1} parent=71 // pred_region
          %p496 = scmp.lt.s32.totalorder %s27, 1
          %s497 = scalar_select %p496, %s27, 1
          %s498 = scalar_lea.vmem %s1, %s497
        $region80: #{bert_classifier_forward.1} parent=71 // pred_fallthru
          _
      $region72: #{bert_classifier_forward.1} parent=5 // pred_fallthru
        _
      %p499 = scmp.le.s32.totalorder 1, %s27
      %p500 = scmp.lt.s32.totalorder %s27, 3
      %p501 = pnand %p499, %p500
      %p502 = pneg %p501
      // Predicated region
      $region81: #{bert_classifier_forward.1} parent=5 // pred_check
        _
      $region82: #{bert_classifier_forward.1} parent=5 // pred_check_branch
        %504 = sbr.rel (%p501) target = $region84
      $region83: #{bert_classifier_forward.1} parent=5 // pred_region
        %s505 = ssub.s32 %s27, 1
        %p506 = scmp.lt.s32.totalorder %s32, 1
        %s507 = scalar_select %p506, %s32, 1
        %s508 = smul.addr %s507, 8
        %s509 = scalar_lea.vmem %s0, %s508
        %p510 = pneg %p53
        %p511 = pneg %p50
        %p512 = scmp.lt.s32.totalorder %s32, 1
        %s513 = scalar_select %p512, %s32, 1
        %s514 = scalar_lea.vmem %s1, %s513
        %p515 = pneg %p79
        %p516 = pneg %p76
        %p517 = pneg %p100
        %p518 = pneg %p97
        %p519 = pneg %p121
        %p520 = pneg %p118
        %p521 = pneg %p142
        %p522 = pneg %p139
        %p523 = pneg %p163
        %p524 = pneg %p160
        %p525 = pneg %p184
        %p526 = pneg %p181
        %p527 = pneg %p205
        %p528 = pneg %p202
        %p529 = pneg %p226
        %p530 = pneg %p223
        %p531 = pneg %p247
        %p532 = pneg %p244
        %p533 = pneg %p268
        %p534 = pneg %p265
        %p535 = pneg %p289
        %p536 = pneg %p286
        %p537 = pneg %p310
        %p538 = pneg %p307
        %p539 = pneg %p331
        %p540 = pneg %p328
        %p541 = pneg %p352
        %p542 = pneg %p349
        %p543 = pneg %p373
        %p544 = pneg %p370
        %p545 = pneg %p399
        %p546 = pneg %p396
        %s547 = sand.u32 %s386, 1
        %s548 = scalar_lea.sflag [#allocation3], %s547
        %s549 = sand.u32 %s386, 1
        %s550 = scalar_lea.vmem [#allocation2], %s549
        %p551 = pneg %p425
        %p552 = pneg %p422
        %p553 = scmp.lt.s32.totalorder %s32, 1
        %s554 = scalar_select %p553, %s32, 1
        %s555 = smul.addr %s554, 4
        %s556 = smul.addr %s555, 8
        %s557 = scalar_lea.vmem %s17, %s556
        %p558 = scmp.lt.s32.totalorder %s32, 1
        %s559 = scalar_select %p558, %s32, 1
        %s560 = smul.addr %s559, 8
        %s561 = scalar_lea.vmem %s0, %s560
        %p562 = scmp.lt.s32.totalorder %s32, 1
        %s563 = scalar_select %p562, %s32, 1
        %s564 = scalar_lea.vmem %s1, %s563
        %p565 = scmp.lt.s32.totalorder %s32, 1
        %s566 = scalar_select %p565, %s32, 1
        %s567 = smul.addr %s566, 4
        %s568 = smul.addr %s567, 8
        %s569 = scalar_lea.vmem %s17, %s568
        %v571 = vld [vmem:[%s561] sm:$0xff]
        %v572 = vld [vmem:[%s564] sm:$0x1]
        %v573 = vld [vmem:[%s2] sm:$0x1]
        %v574 = vld [vmem:[%s2 + $0x1] sm:$0x1]
        %vm575 = vcmask 261120
        %v576 = vsel %vm575, %v571, 0.0
        %577 = vadd.xlane.f32.xlu0 %v576
        %v578 = vpop.xlane.xlu0 %577
        %v579 = vrcp.pop 32.0
        %v580 = vmul.f32 %v578, %v579
        %v581 = vsub.f32 %v571, %v580
        %v582 = vmul.f32 %v581, %v581
        %v583 = vsel %vm575, %v582, 0.0
        %584 = vadd.xlane.f32.xlu0 %v583
        %v585 = vpop.xlane.xlu0 %584
        %v586 = vmul.f32 %v585, %v579
        %v587 = vadd.f32 %v586, 1e-12
        %v588 = vrsqrt.pop %v587
        %v589 = vmul.f32 %v581, %v588
        %v590 = vlaneseq
        %v591 = vshrl.u32 %v590, 7
        %v592 = vsub.s32 0, %v591
        %v593 = vrot.slane %v573, %v592
        %v594 = vmul.f32 %v589, %v593
        %v595 = vlaneseq
        %v596 = vshrl.u32 %v595, 7
        %v597 = vsub.s32 0, %v596
        %v598 = vrot.slane %v574, %v597
        %v599 = vadd.f32 %v594, %v598
        %v600 = vld [vmem:[%s3] sm:$0xf]
        %v601 = vld [vmem:[%s3 + $0x4] sm:$0xf]
        %v602 = vld [vmem:[%s3 + $0x8] sm:$0xf]
        %v603 = vld [vmem:[%s3 + $0xc] sm:$0xf]
        %v604 = vld [vmem:[%s4] sm:$0x1]
        %v605 = vpack.c.bf16 %v599, %v599
        %v607 = vlaneseq
        %v608 = vshrl.u32 %v607, 7
        %v609 = vsub.s32 0, %v608
        %v610 = vrot.slane %v604, %v609
        %v616 = vunpack.c.l.b16 %v600
        %v617 = vunpack.c.l.b16 %v601
        %v618 = vunpack.c.l.b16 %v602
        %v619 = vunpack.c.l.b16 %v603
        %v620 = vpack.c.b16 %v617, %v616
        %v621 = vpack.c.b16 %v619, %v618
        %v625 = vsel %vm575, %v605, 0
        %627 = vmatprep.subr.bf16.mxu0 0
        %628 = vmatpush1.bf16.msra.mxu0 %v620
        %629 = vmatprep.subr.bf16.mxu0 0
        %630 = vmatpush1.bf16.msra.mxu0 %v621
        %631 = vmatprep.subr.bf16.mxu0 0
        %632 = vmatpush1.bf16.msra.mxu0 0
        %633 = vmatprep.subr.bf16.mxu0 0
        %634 = vmatpush1.bf16.msra.mxu0 0
        %635 = vmatprep.subr.bf16.mxu0 0
        %636 = vmatpush1.bf16.msra.mxu0 0
        %637 = vmatprep.subr.bf16.mxu0 0
        %638 = vmatpush1.bf16.msra.mxu0 0
        %639 = vmatprep.subr.bf16.mxu0 0
        %640 = vmatpush1.bf16.msra.mxu0 0
        %641 = vmatprep.subr.bf16.mxu0 0
        %642 = vmatpush1.bf16.msra.mxu0 0
        %643 = vmatprep.subr.bf16.mxu0 0
        %644 = vmatpush1.bf16.msra.mxu0 0
        %645 = vmatprep.subr.bf16.mxu0 0
        %646 = vmatpush1.bf16.msra.mxu0 0
        %647 = vmatprep.subr.bf16.mxu0 0
        %648 = vmatpush1.bf16.msra.mxu0 0
        %649 = vmatprep.subr.bf16.mxu0 0
        %650 = vmatpush1.bf16.msra.mxu0 0
        %651 = vmatprep.subr.bf16.mxu0 0
        %652 = vmatpush1.bf16.msra.mxu0 0
        %653 = vmatprep.subr.bf16.mxu0 0
        %654 = vmatpush1.bf16.msra.mxu0 0
        %655 = vmatprep.subr.bf16.mxu0 0
        %656 = vmatpush1.bf16.msra.mxu0 0
        %657 = vmatprep.subr.bf16.mxu0 0
        %658 = vmatpush1.bf16.msra.mxu0 0
        %659 = vmatprep.mubr.bf16.mxu0 0
        %660 = vmatmul.mubr.bf16.gmra.mrb[0].mxu0 %v625
        %v661 = vpop.f32.mrb[0].mxu0
        %v662 = vadd.f32 %v610, %v661
        %v663 = vpop.f32.mrb[0].mxu0
        %v664 = vpop.f32.mrb[0].mxu0
        %v665 = vpop.f32.mrb[0].mxu0
        %666 = vdwg.mxu0
        %v667 = vpack.c.bf16 %v662, %v662
        %v669 = vlaneseq
        %v670 = vshrl.u32 %v669, 7
        %v671 = vsub.s32 0, %v670
        %v672 = vrot.slane %v572, %v671
        %675 = vrot.lane.b32.xlu0 %v667, 96
        %v676 = vpop.permute.xlu0 %675
        %vm677 = vcmask 130048
        %v679 = vsel %vm677, %v667, 0
        %v682 = vsel %vm677, %v676, 0
        %684 = vmatprep.subr.bf16.mxu0 0
        %685 = vmatpush1.bf16.xpose.msra.mxu0 %v682
        %686 = vmatprep.subr.bf16.mxu0 0
        %687 = vmatpush1.bf16.xpose.msra.mxu0 0
        %688 = vmatprep.subr.bf16.mxu0 0
        %689 = vmatpush1.bf16.xpose.msra.mxu0 0
        %690 = vmatprep.subr.bf16.mxu0 0
        %691 = vmatpush1.bf16.xpose.msra.mxu0 0
        %692 = vmatprep.subr.bf16.mxu0 0
        %693 = vmatpush1.bf16.xpose.msra.mxu0 0
        %694 = vmatprep.subr.bf16.mxu0 0
        %695 = vmatpush1.bf16.xpose.msra.mxu0 0
        %696 = vmatprep.subr.bf16.mxu0 0
        %697 = vmatpush1.bf16.xpose.msra.mxu0 0
        %698 = vmatprep.subr.bf16.mxu0 0
        %699 = vmatpush1.bf16.xpose.msra.mxu0 0
        %700 = vmatprep.subr.bf16.mxu0 0
        %701 = vmatpush1.bf16.xpose.msra.mxu0 0
        %702 = vmatprep.subr.bf16.mxu0 0
        %703 = vmatpush1.bf16.xpose.msra.mxu0 0
        %704 = vmatprep.subr.bf16.mxu0 0
        %705 = vmatpush1.bf16.xpose.msra.mxu0 0
        %706 = vmatprep.subr.bf16.mxu0 0
        %707 = vmatpush1.bf16.xpose.msra.mxu0 0
        %708 = vmatprep.subr.bf16.mxu0 0
        %709 = vmatpush1.bf16.xpose.msra.mxu0 0
        %710 = vmatprep.subr.bf16.mxu0 0
        %711 = vmatpush1.bf16.xpose.msra.mxu0 0
        %712 = vmatprep.subr.bf16.mxu0 0
        %713 = vmatpush1.bf16.xpose.msra.mxu0 0
        %714 = vmatprep.subr.bf16.mxu0 0
        %715 = vmatpush1.bf16.xpose.msra.mxu0 0
        %716 = vmatprep.mubr.bf16.mxu0 0
        %717 = vmatmul.mubr.bf16.gmra.mrb[0].mxu0 %v679
        %v718 = vpop.f32.mrb[0].mxu0
        %v719 = vadd.f32 %v672, %v718
        %v720 = vpop.f32.mrb[0].mxu0
        %v721 = vpop.f32.mrb[0].mxu0
        %v722 = vpop.f32.mrb[0].mxu0
        %723 = vdwg.mxu0
        %vm724 = vcmask 64512
        %v725 = vsel %vm724, %v719, -inf
        %726 = vmax.xlane.f32.xlu0 %v725
        %v727 = vpop.xlane.xlu0 %726
        %v728 = vsub.f32 %v719, %v727
        %v729 = vmul.f32 %v728, 1.442695
        %v730 = vpow.pop %v729
        %v731 = vsel %vm724, %v730, 0.0
        %732 = vadd.xlane.f32.xlu0 %v731
        %v733 = vpop.xlane.xlu0 %732
        %v734 = vrcp.pop %v733
        %v735 = vmul.f32 %v730, %v734
        %736 = vst.msk [vmem:[%s569] sm:$0xff] %vm724, %v735
        %v737 = vpack.c.bf16 %v735, %v735
        %738 = vrot.lane.b32.xlu0 %v667, 64
        %v739 = vpop.permute.xlu0 %738
        %v741 = vsel %vm724, %v737, 0
        %vm743 = vcmask 1043456
        %v745 = vsel %vm743, %v739, 0
        %747 = vmatprep.subr.bf16.mxu0 0
        %748 = vmatpush1.bf16.msra.mxu0 %v745
        %749 = vmatprep.subr.bf16.mxu0 0
        %750 = vmatpush1.bf16.msra.mxu0 0
        %751 = vmatprep.subr.bf16.mxu0 0
        %752 = vmatpush1.bf16.msra.mxu0 0
        %753 = vmatprep.subr.bf16.mxu0 0
        %754 = vmatpush1.bf16.msra.mxu0 0
        %755 = vmatprep.subr.bf16.mxu0 0
        %756 = vmatpush1.bf16.msra.mxu0 0
        %757 = vmatprep.subr.bf16.mxu0 0
        %758 = vmatpush1.bf16.msra.mxu0 0
        %759 = vmatprep.subr.bf16.mxu0 0
        %760 = vmatpush1.bf16.msra.mxu0 0
        %761 = vmatprep.subr.bf16.mxu0 0
        %762 = vmatpush1.bf16.msra.mxu0 0
        %763 = vmatprep.subr.bf16.mxu0 0
        %764 = vmatpush1.bf16.msra.mxu0 0
        %765 = vmatprep.subr.bf16.mxu0 0
        %766 = vmatpush1.bf16.msra.mxu0 0
        %767 = vmatprep.subr.bf16.mxu0 0
        %768 = vmatpush1.bf16.msra.mxu0 0
        %769 = vmatprep.subr.bf16.mxu0 0
        %770 = vmatpush1.bf16.msra.mxu0 0
        %771 = vmatprep.subr.bf16.mxu0 0
        %772 = vmatpush1.bf16.msra.mxu0 0
        %773 = vmatprep.subr.bf16.mxu0 0
        %774 = vmatpush1.bf16.msra.mxu0 0
        %775 = vmatprep.subr.bf16.mxu0 0
        %776 = vmatpush1.bf16.msra.mxu0 0
        %777 = vmatprep.subr.bf16.mxu0 0
        %778 = vmatpush1.bf16.msra.mxu0 0
        %779 = vmatprep.mubr.bf16.mxu0 0
        %780 = vmatmul.mubr.bf16.gmra.mrb[0].mxu0 %v741
        %v781 = vpop.f32.mrb[0].mxu0
        %v782 = vadd.f32 0.0, %v781
        %v783 = vpop.f32.mrb[0].mxu0
        %v784 = vpop.f32.mrb[0].mxu0
        %v785 = vpop.f32.mrb[0].mxu0
        %786 = vdwg.mxu0
        %787 = vrot.lane.b32.xlu0 %v667, 112
        %v788 = vpop.permute.xlu0 %787
        %789 = vrot.lane.b32.xlu0 %v667, 80
        %v790 = vpop.permute.xlu0 %789
        %v792 = vsel %vm677, %v788, 0
        %v795 = vsel %vm677, %v790, 0
        %797 = vmatprep.subr.bf16.mxu0 0
        %798 = vmatpush1.bf16.xpose.msra.mxu0 %v795
        %799 = vmatprep.subr.bf16.mxu0 0
        %800 = vmatpush1.bf16.xpose.msra.mxu0 0
        %801 = vmatprep.subr.bf16.mxu0 0
        %802 = vmatpush1.bf16.xpose.msra.mxu0 0
        %803 = vmatprep.subr.bf16.mxu0 0
        %804 = vmatpush1.bf16.xpose.msra.mxu0 0
        %805 = vmatprep.subr.bf16.mxu0 0
        %806 = vmatpush1.bf16.xpose.msra.mxu0 0
        %807 = vmatprep.subr.bf16.mxu0 0
        %808 = vmatpush1.bf16.xpose.msra.mxu0 0
        %809 = vmatprep.subr.bf16.mxu0 0
        %810 = vmatpush1.bf16.xpose.msra.mxu0 0
        %811 = vmatprep.subr.bf16.mxu0 0
        %812 = vmatpush1.bf16.xpose.msra.mxu0 0
        %813 = vmatprep.subr.bf16.mxu0 0
        %814 = vmatpush1.bf16.xpose.msra.mxu0 0
        %815 = vmatprep.subr.bf16.mxu0 0
        %816 = vmatpush1.bf16.xpose.msra.mxu0 0
        %817 = vmatprep.subr.bf16.mxu0 0
        %818 = vmatpush1.bf16.xpose.msra.mxu0 0
        %819 = vmatprep.subr.bf16.mxu0 0
        %820 = vmatpush1.bf16.xpose.msra.mxu0 0
        %821 = vmatprep.subr.bf16.mxu0 0
        %822 = vmatpush1.bf16.xpose.msra.mxu0 0
        %823 = vmatprep.subr.bf16.mxu0 0
        %824 = vmatpush1.bf16.xpose.msra.mxu0 0
        %825 = vmatprep.subr.bf16.mxu0 0
        %826 = vmatpush1.bf16.xpose.msra.mxu0 0
        %827 = vmatprep.subr.bf16.mxu0 0
        %828 = vmatpush1.bf16.xpose.msra.mxu0 0
        %829 = vmatprep.mubr.bf16.mxu0 0
        %830 = vmatmul.mubr.bf16.gmra.mrb[0].mxu0 %v792
        %v831 = vpop.f32.mrb[0].mxu0
        %v832 = vadd.f32 %v672, %v831
        %v833 = vpop.f32.mrb[0].mxu0
        %v834 = vpop.f32.mrb[0].mxu0
        %v835 = vpop.f32.mrb[0].mxu0
        %836 = vdwg.mxu0
        %v837 = vsel %vm724, %v832, -inf
        %838 = vmax.xlane.f32.xlu0 %v837
        %v839 = vpop.xlane.xlu0 %838
        %v840 = vsub.f32 %v832, %v839
        %v841 = vmul.f32 %v840, 1.442695
        %v842 = vpow.pop %v841
        %v843 = vsel %vm724, %v842, 0.0
        %844 = vadd.xlane.f32.xlu0 %v843
        %v845 = vpop.xlane.xlu0 %844
        %v846 = vrcp.pop %v845
        %v847 = vmul.f32 %v842, %v846
        %848 = vst.msk [vmem:[%s569 + $0x8] sm:$0xff] %vm724, %v847
        %v849 = vpack.c.bf16 %v847, %v847
        %850 = vrot.lane.b32.xlu0 %v667, 48
        %v851 = vpop.permute.xlu0 %850
        %v853 = vsel %vm724, %v849, 0
        %v856 = vsel %vm743, %v851, 0
        %858 = vmatprep.subr.bf16.mxu0 0
        %859 = vmatpush1.bf16.msra.mxu0 %v856
        %860 = vmatprep.subr.bf16.mxu0 0
        %861 = vmatpush1.bf16.msra.mxu0 0
        %862 = vmatprep.subr.bf16.mxu0 0
        %863 = vmatpush1.bf16.msra.mxu0 0
        %864 = vmatprep.subr.bf16.mxu0 0
        %865 = vmatpush1.bf16.msra.mxu0 0
        %866 = vmatprep.subr.bf16.mxu0 0
        %867 = vmatpush1.bf16.msra.mxu0 0
        %868 = vmatprep.subr.bf16.mxu0 0
        %869 = vmatpush1.bf16.msra.mxu0 0
        %870 = vmatprep.subr.bf16.mxu0 0
        %871 = vmatpush1.bf16.msra.mxu0 0
        %872 = vmatprep.subr.bf16.mxu0 0
        %873 = vmatpush1.bf16.msra.mxu0 0
        %874 = vmatprep.subr.bf16.mxu0 0
        %875 = vmatpush1.bf16.msra.mxu0 0
        %876 = vmatprep.subr.bf16.mxu0 0
        %877 = vmatpush1.bf16.msra.mxu0 0
        %878 = vmatprep.subr.bf16.mxu0 0
        %879 = vmatpush1.bf16.msra.mxu0 0
        %880 = vmatprep.subr.bf16.mxu0 0
        %881 = vmatpush1.bf16.msra.mxu0 0
        %882 = vmatprep.subr.bf16.mxu0 0
        %883 = vmatpush1.bf16.msra.mxu0 0
        %884 = vmatprep.subr.bf16.mxu0 0
        %885 = vmatpush1.bf16.msra.mxu0 0
        %886 = vmatprep.subr.bf16.mxu0 0
        %887 = vmatpush1.bf16.msra.mxu0 0
        %888 = vmatprep.subr.bf16.mxu0 0
        %889 = vmatpush1.bf16.msra.mxu0 0
        %890 = vmatprep.mubr.bf16.mxu0 0
        %891 = vmatmul.mubr.bf16.gmra.mrb[0].mxu0 %v853
        %v892 = vpop.f32.mrb[0].mxu0
        %v893 = vadd.f32 0.0, %v892
        %v894 = vpop.f32.mrb[0].mxu0
        %v895 = vpop.f32.mrb[0].mxu0
        %v896 = vpop.f32.mrb[0].mxu0
        %897 = vdwg.mxu0
        %899 = vrot.lane.b32.xlu0 %v893, 16
        %v900 = vpop.permute.xlu0 %899
        %v902 = vsel %vm677, %v782, %v900
        %v903 = vld [vmem:[%s5] sm:$0xf]
        %v904 = vld [vmem:[%s5 + $0x4] sm:$0xf]
        %v905 = vld [vmem:[%s5 + $0x8] sm:$0xf]
        %v906 = vld [vmem:[%s5 + $0xc] sm:$0xf]
        %v907 = vld [vmem:[%s6] sm:$0x1]
        %v908 = vpack.c.bf16 %v902, %v902
        %v910 = vlaneseq
        %v911 = vshrl.u32 %v910, 7
        %v912 = vsub.s32 0, %v911
        %v913 = vrot.slane %v907, %v912
        %v919 = vunpack.c.l.b16 %v903
        %v920 = vunpack.c.l.b16 %v904
        %v921 = vunpack.c.l.b16 %v905
        %v922 = vunpack.c.l.b16 %v906
        %v923 = vpack.c.b16 %v920, %v919
        %v924 = vpack.c.b16 %v922, %v921
        %v928 = vsel %vm575, %v908, 0
        %930 = vmatprep.subr.bf16.mxu0 0
        %931 = vmatpush1.bf16.msra.mxu0 %v923
        %932 = vmatprep.subr.bf16.mxu0 0
        %933 = vmatpush1.bf16.msra.mxu0 %v924
        %934 = vmatprep.subr.bf16.mxu0 0
        %935 = vmatpush1.bf16.msra.mxu0 0
        %936 = vmatprep.subr.bf16.mxu0 0
        %937 = vmatpush1.bf16.msra.mxu0 0
        %938 = vmatprep.subr.bf16.mxu0 0
        %939 = vmatpush1.bf16.msra.mxu0 0
        %940 = vmatprep.subr.bf16.mxu0 0
        %941 = vmatpush1.bf16.msra.mxu0 0
        %942 = vmatprep.subr.bf16.mxu0 0
        %943 = vmatpush1.bf16.msra.mxu0 0
        %944 = vmatprep.subr.bf16.mxu0 0
        %945 = vmatpush1.bf16.msra.mxu0 0
        %946 = vmatprep.subr.bf16.mxu0 0
        %947 = vmatpush1.bf16.msra.mxu0 0
        %948 = vmatprep.subr.bf16.mxu0 0
        %949 = vmatpush1.bf16.msra.mxu0 0
        %950 = vmatprep.subr.bf16.mxu0 0
        %951 = vmatpush1.bf16.msra.mxu0 0
        %952 = vmatprep.subr.bf16.mxu0 0
        %953 = vmatpush1.bf16.msra.mxu0 0
        %954 = vmatprep.subr.bf16.mxu0 0
        %955 = vmatpush1.bf16.msra.mxu0 0
        %956 = vmatprep.subr.bf16.mxu0 0
        %957 = vmatpush1.bf16.msra.mxu0 0
        %958 = vmatprep.subr.bf16.mxu0 0
        %959 = vmatpush1.bf16.msra.mxu0 0
        %960 = vmatprep.subr.bf16.mxu0 0
        %961 = vmatpush1.bf16.msra.mxu0 0
        %962 = vmatprep.mubr.bf16.mxu0 0
        %963 = vmatmul.mubr.bf16.gmra.mrb[0].mxu0 %v928
        %v964 = vpop.f32.mrb[0].mxu0
        %v965 = vadd.f32 %v913, %v964
        %v966 = vpop.f32.mrb[0].mxu0
        %v967 = vpop.f32.mrb[0].mxu0
        %v968 = vpop.f32.mrb[0].mxu0
        %969 = vdwg.mxu0
        %v970 = vld [vmem:[%s11] sm:$0xf]
        %v971 = vadd.f32 %v965, %v599
        %v972 = vsel %vm575, %v971, 0.0
        %973 = vadd.xlane.f32.xlu0 %v972
        %v974 = vpop.xlane.xlu0 %973
        %v975 = vmul.f32 %v974, %v579
        %v976 = vsub.f32 %v971, %v975
        %v977 = vmul.f32 %v976, %v976
        %v978 = vsel %vm575, %v977, 0.0
        %979 = vadd.xlane.f32.xlu0 %v978
        %v980 = vpop.xlane.xlu0 %979
        %v981 = vmul.f32 %v980, %v579
        %v982 = vadd.f32 %v981, 1e-12
        %v983 = vrsqrt.pop %v982
        %v984 = vmul.f32 %v976, %v983
        %v985 = vlaneseq
        %v986 = vshrl.u32 %v985, 7
        %v987 = vsub.s32 0, %v986
        %v988 = vrot.slane %v970, %v987
        %v989 = vmul.f32 %v984, %v988
        %v990 = vlaneseq
        %v991 = vshrl.u32 %v990, 7
        %v992 = vsub.s32 1, %v991
        %v993 = vrot.slane %v970, %v992
        %v994 = vadd.f32 %v989, %v993
        %v995 = vld [vmem:[%s7] sm:$0xf]
        %v996 = vld [vmem:[%s7 + $0x4] sm:$0xf]
        %v997 = vld [vmem:[%s7 + $0x8] sm:$0xf]
        %v998 = vld [vmem:[%s7 + $0xc] sm:$0xf]
        %v999 = vld [vmem:[%s8] sm:$0x1]
        %v1000 = vpack.c.bf16 %v994, %v994
        %v1002 = vlaneseq
        %v1003 = vshrl.u32 %v1002, 7
        %v1004 = vsub.s32 0, %v1003
        %v1005 = vrot.slane %v999, %v1004
        %v1011 = vunpack.c.l.b16 %v995
        %v1012 = vunpack.c.l.b16 %v996
        %v1013 = vunpack.c.l.b16 %v997
        %v1014 = vunpack.c.l.b16 %v998
        %v1015 = vpack.c.b16 %v1012, %v1011
        %v1016 = vpack.c.b16 %v1014, %v1013
        %v1020 = vsel %vm575, %v1000, 0
        %1022 = vmatprep.subr.bf16.mxu0 0
        %1023 = vmatpush1.bf16.msra.mxu0 %v1015
        %1024 = vmatprep.subr.bf16.mxu0 0
        %1025 = vmatpush1.bf16.msra.mxu0 %v1016
        %1026 = vmatprep.subr.bf16.mxu0 0
        %1027 = vmatpush1.bf16.msra.mxu0 0
        %1028 = vmatprep.subr.bf16.mxu0 0
        %1029 = vmatpush1.bf16.msra.mxu0 0
        %1030 = vmatprep.subr.bf16.mxu0 0
        %1031 = vmatpush1.bf16.msra.mxu0 0
        %1032 = vmatprep.subr.bf16.mxu0 0
        %1033 = vmatpush1.bf16.msra.mxu0 0
        %1034 = vmatprep.subr.bf16.mxu0 0
        %1035 = vmatpush1.bf16.msra.mxu0 0
        %1036 = vmatprep.subr.bf16.mxu0 0
        %1037 = vmatpush1.bf16.msra.mxu0 0
        %1038 = vmatprep.subr.bf16.mxu0 0
        %1039 = vmatpush1.bf16.msra.mxu0 0
        %1040 = vmatprep.subr.bf16.mxu0 0
        %1041 = vmatpush1.bf16.msra.mxu0 0
        %1042 = vmatprep.subr.bf16.mxu0 0
        %1043 = vmatpush1.bf16.msra.mxu0 0
        %1044 = vmatprep.subr.bf16.mxu0 0
        %1045 = vmatpush1.bf16.msra.mxu0 0
        %1046 = vmatprep.subr.bf16.mxu0 0
        %1047 = vmatpush1.bf16.msra.mxu0 0
        %1048 = vmatprep.subr.bf16.mxu0 0
        %1049 = vmatpush1.bf16.msra.mxu0 0
        %1050 = vmatprep.subr.bf16.mxu0 0
        %1051 = vmatpush1.bf16.msra.mxu0 0
        %1052 = vmatprep.subr.bf16.mxu0 0
        %1053 = vmatpush1.bf16.msra.mxu0 0
        %1054 = vmatprep.mubr.bf16.mxu0 0
        %1055 = vmatmul.mubr.bf16.gmra.mrb[0].mxu0 %v1020
        %v1056 = vpop.f32.mrb[0].mxu0
        %v1057 = vadd.f32 %v1005, %v1056
        %v1058 = vpop.f32.mrb[0].mxu0
        %v1059 = vpop.f32.mrb[0].mxu0
        %v1060 = vpop.f32.mrb[0].mxu0
        %1061 = vdwg.mxu0
        %v1062 = vmul.f32 %v1057, 0.5
        %v1063 = vmul.f32 %v1057, 0.044715
        %v1064 = vmul.f32 %v1063, %v1057
        %v1065 = vmul.f32 %v1064, %v1057
        %v1066 = vadd.f32 %v1057, %v1065
        %v1067 = vmul.f32 %v1066, 0.7978846
        %v1068 = vtanh.pop %v1067
        %v1069 = vadd.f32 %v1068, 1.0
        %v1070 = vmul.f32 %v1062, %v1069
        %v1071 = vld [vmem:[%s9] sm:$0xf]
        %v1072 = vld [vmem:[%s9 + $0x4] sm:$0xf]
        %v1073 = vld [vmem:[%s9 + $0x8] sm:$0xf]
        %v1074 = vld [vmem:[%s9 + $0xc] sm:$0xf]
        %v1075 = vld [vmem:[%s9 + $0x10] sm:$0xf]
        %v1076 = vld [vmem:[%s9 + $0x14] sm:$0xf]
        %v1077 = vld [vmem:[%s9 + $0x18] sm:$0xf]
        %v1078 = vld [vmem:[%s9 + $0x1c] sm:$0xf]
        %v1079 = vld [vmem:[%s10] sm:$0x1]
        %v1080 = vpack.c.bf16 %v1070, %v1070
        %v1082 = vlaneseq
        %v1083 = vshrl.u32 %v1082, 7
        %v1084 = vsub.s32 0, %v1083
        %v1085 = vrot.slane %v1079, %v1084
        %v1095 = vunpack.c.l.b16 %v1071
        %v1096 = vunpack.c.l.b16 %v1072
        %v1097 = vunpack.c.l.b16 %v1073
        %v1098 = vunpack.c.l.b16 %v1074
        %v1099 = vunpack.c.l.b16 %v1075
        %v1100 = vunpack.c.l.b16 %v1076
        %v1101 = vunpack.c.l.b16 %v1077
        %v1102 = vunpack.c.l.b16 %v1078
        %v1103 = vpack.c.b16 %v1096, %v1095
        %v1104 = vpack.c.b16 %v1098, %v1097
        %v1105 = vpack.c.b16 %v1100, %v1099
        %v1106 = vpack.c.b16 %v1102, %v1101
        %vm1111 = vcmask 523264
        %v1113 = vsel %vm1111, %v1080, 0
        %1115 = vmatprep.subr.bf16.mxu0 0
        %1116 = vmatpush1.bf16.msra.mxu0 %v1103
        %1117 = vmatprep.subr.bf16.mxu0 0
        %1118 = vmatpush1.bf16.msra.mxu0 %v1104
        %1119 = vmatprep.subr.bf16.mxu0 0
        %1120 = vmatpush1.bf16.msra.mxu0 %v1105
        %1121 = vmatprep.subr.bf16.mxu0 0
        %1122 = vmatpush1.bf16.msra.mxu0 %v1106
        %1123 = vmatprep.subr.bf16.mxu0 0
        %1124 = vmatpush1.bf16.msra.mxu0 0
        %1125 = vmatprep.subr.bf16.mxu0 0
        %1126 = vmatpush1.bf16.msra.mxu0 0
        %1127 = vmatprep.subr.bf16.mxu0 0
        %1128 = vmatpush1.bf16.msra.mxu0 0
        %1129 = vmatprep.subr.bf16.mxu0 0
        %1130 = vmatpush1.bf16.msra.mxu0 0
        %1131 = vmatprep.subr.bf16.mxu0 0
        %1132 = vmatpush1.bf16.msra.mxu0 0
        %1133 = vmatprep.subr.bf16.mxu0 0
        %1134 = vmatpush1.bf16.msra.mxu0 0
        %1135 = vmatprep.subr.bf16.mxu0 0
        %1136 = vmatpush1.bf16.msra.mxu0 0
        %1137 = vmatprep.subr.bf16.mxu0 0
        %1138 = vmatpush1.bf16.msra.mxu0 0
        %1139 = vmatprep.subr.bf16.mxu0 0
        %1140 = vmatpush1.bf16.msra.mxu0 0
        %1141 = vmatprep.subr.bf16.mxu0 0
        %1142 = vmatpush1.bf16.msra.mxu0 0
        %1143 = vmatprep.subr.bf16.mxu0 0
        %1144 = vmatpush1.bf16.msra.mxu0 0
        %1145 = vmatprep.subr.bf16.mxu0 0
        %1146 = vmatpush1.bf16.msra.mxu0 0
        %1147 = vmatprep.mubr.bf16.mxu0 0
        %1148 = vmatmul.mubr.bf16.gmra.mrb[0].mxu0 %v1113
        %v1149 = vpop.f32.mrb[0].mxu0
        %v1150 = vadd.f32 %v1085, %v1149
        %v1151 = vpop.f32.mrb[0].mxu0
        %v1152 = vpop.f32.mrb[0].mxu0
        %v1153 = vpop.f32.mrb[0].mxu0
        %1154 = vdwg.mxu0
        %v1155 = vadd.f32 %v1150, %v994
        %v1156 = vsel %vm575, %v1155, 0.0
        %1157 = vadd.xlane.f32.xlu0 %v1156
        %v1158 = vpop.xlane.xlu0 %1157
        %v1159 = vmul.f32 %v1158, %v579
        %v1160 = vsub.f32 %v1155, %v1159
        %v1161 = vmul.f32 %v1160, %v1160
        %v1162 = vsel %vm575, %v1161, 0.0
        %1163 = vadd.xlane.f32.xlu0 %v1162
        %v1164 = vpop.xlane.xlu0 %1163
        %v1165 = vmul.f32 %v1164, %v579
        %v1166 = vadd.f32 %v1165, 1e-12
        %v1167 = vrsqrt.pop %v1166
        %v1168 = vmul.f32 %v1160, %v1167
        %v1169 = vlaneseq
        %v1170 = vshrl.u32 %v1169, 7
        %v1171 = vsub.s32 2, %v1170
        %v1172 = vrot.slane %v970, %v1171
        %v1173 = vmul.f32 %v1168, %v1172
        %v1174 = vlaneseq
        %v1175 = vshrl.u32 %v1174, 7
        %v1176 = vsub.s32 3, %v1175
        %v1177 = vrot.slane %v970, %v1176
        %v1178 = vadd.f32 %v1173, %v1177
        %s1179 = scalar_lea.vmem %s3, 16
        %v1180 = vld [vmem:[%s1179] sm:$0xf]
        %v1181 = vld [vmem:[%s1179 + $0x4] sm:$0xf]
        %v1182 = vld [vmem:[%s1179 + $0x8] sm:$0xf]
        %v1183 = vld [vmem:[%s1179 + $0xc] sm:$0xf]
        %s1184 = scalar_lea.vmem %s4, 1
        %v1185 = vld [vmem:[%s1184] sm:$0x1]
        %v1186 = vpack.c.bf16 %v1178, %v1178
        %v1188 = vlaneseq
        %v1189 = vshrl.u32 %v1188, 7
        %v1190 = vsub.s32 0, %v1189
        %v1191 = vrot.slane %v1185, %v1190
        %v1197 = vunpack.c.l.b16 %v1180
        %v1198 = vunpack.c.l.b16 %v1181
        %v1199 = vunpack.c.l.b16 %v1182
        %v1200 = vunpack.c.l.b16 %v1183
        %v1201 = vpack.c.b16 %v1198, %v1197
        %v1202 = vpack.c.b16 %v1200, %v1199
        %v1206 = vsel %vm575, %v1186, 0
        %1208 = vmatprep.subr.bf16.mxu0 0
        %1209 = vmatpush1.bf16.msra.mxu0 %v1201
        %1210 = vmatprep.subr.bf16.mxu0 0
        %1211 = vmatpush1.bf16.msra.mxu0 %v1202
        %1212 = vmatprep.subr.bf16.mxu0 0
        %1213 = vmatpush1.bf16.msra.mxu0 0
        %1214 = vmatprep.subr.bf16.mxu0 0
        %1215 = vmatpush1.bf16.msra.mxu0 0
        %1216 = vmatprep.subr.bf16.mxu0 0
        %1217 = vmatpush1.bf16.msra.mxu0 0
        %1218 = vmatprep.subr.bf16.mxu0 0
        %1219 = vmatpush1.bf16.msra.mxu0 0
        %1220 = vmatprep.subr.bf16.mxu0 0
        %1221 = vmatpush1.bf16.msra.mxu0 0
        %1222 = vmatprep.subr.bf16.mxu0 0
        %1223 = vmatpush1.bf16.msra.mxu0 0
        %1224 = vmatprep.subr.bf16.mxu0 0
        %1225 = vmatpush1.bf16.msra.mxu0 0
        %1226 = vmatprep.subr.bf16.mxu0 0
        %1227 = vmatpush1.bf16.msra.mxu0 0
        %1228 = vmatprep.subr.bf16.mxu0 0
        %1229 = vmatpush1.bf16.msra.mxu0 0
        %1230 = vmatprep.subr.bf16.mxu0 0
        %1231 = vmatpush1.bf16.msra.mxu0 0
        %1232 = vmatprep.subr.bf16.mxu0 0
        %1233 = vmatpush1.bf16.msra.mxu0 0
        %1234 = vmatprep.subr.bf16.mxu0 0
        %1235 = vmatpush1.bf16.msra.mxu0 0
        %1236 = vmatprep.subr.bf16.mxu0 0
        %1237 = vmatpush1.bf16.msra.mxu0 0
        %1238 = vmatprep.subr.bf16.mxu0 0
        %1239 = vmatpush1.bf16.msra.mxu0 0
        %1240 = vmatprep.mubr.bf16.mxu0 0
        %1241 = vmatmul.mubr.bf16.gmra.mrb[0].mxu0 %v1206
        %v1242 = vpop.f32.mrb[0].mxu0
        %v1243 = vadd.f32 %v1191, %v1242
        %v1244 = vpop.f32.mrb[0].mxu0
        %v1245 = vpop.f32.mrb[0].mxu0
        %v1246 = vpop.f32.mrb[0].mxu0
        %1247 = vdwg.mxu0
        %v1248 = vpack.c.bf16 %v1243, %v1243
        %1250 = vrot.lane.b32.xlu0 %v1248, 96
        %v1251 = vpop.permute.xlu0 %1250
        %v1253 = vsel %vm677, %v1248, 0
        %v1256 = vsel %vm677, %v1251, 0
        %1258 = vmatprep.subr.bf16.mxu0 0
        %1259 = vmatpush1.bf16.xpose.msra.mxu0 %v1256
        %1260 = vmatprep.subr.bf16.mxu0 0
        %1261 = vmatpush1.bf16.xpose.msra.mxu0 0
        %1262 = vmatprep.subr.bf16.mxu0 0
        %1263 = vmatpush1.bf16.xpose.msra.mxu0 0
        %1264 = vmatprep.subr.bf16.mxu0 0
        %1265 = vmatpush1.bf16.xpose.msra.mxu0 0
        %1266 = vmatprep.subr.bf16.mxu0 0
        %1267 = vmatpush1.bf16.xpose.msra.mxu0 0
        %1268 = vmatprep.subr.bf16.mxu0 0
        %1269 = vmatpush1.bf16.xpose.msra.mxu0 0
        %1270 = vmatprep.subr.bf16.mxu0 0
        %1271 = vmatpush1.bf16.xpose.msra.mxu0 0
        %1272 = vmatprep.subr.bf16.mxu0 0
        %1273 = vmatpush1.bf16.xpose.msra.mxu0 0
        %1274 = vmatprep.subr.bf16.mxu0 0
        %1275 = vmatpush1.bf16.xpose.msra.mxu0 0
        %1276 = vmatprep.subr.bf16.mxu0 0
        %1277 = vmatpush1.bf16.xpose.msra.mxu0 0
        %1278 = vmatprep.subr.bf16.mxu0 0
        %1279 = vmatpush1.bf16.xpose.msra.mxu0 0
        %1280 = vmatprep.subr.bf16.mxu0 0
        %1281 = vmatpush1.bf16.xpose.msra.mxu0 0
        %1282 = vmatprep.subr.bf16.mxu0 0
        %1283 = vmatpush1.bf16.xpose.msra.mxu0 0
        %1284 = vmatprep.subr.bf16.mxu0 0
        %1285 = vmatpush1.bf16.xpose.msra.mxu0 0
        %1286 = vmatprep.subr.bf16.mxu0 0
        %1287 = vmatpush1.bf16.xpose.msra.mxu0 0
        %1288 = vmatprep.subr.bf16.mxu0 0
        %1289 = vmatpush1.bf16.xpose.msra.mxu0 0
        %1290 = vmatprep.mubr.bf16.mxu0 0
        %1291 = vmatmul.mubr.bf16.gmra.mrb[0].mxu0 %v1253
        %v1292 = vpop.f32.mrb[0].mxu0
        %v1293 = vadd.f32 %v672, %v1292
        %v1294 = vpop.f32.mrb[0].mxu0
        %v1295 = vpop.f32.mrb[0].mxu0
        %v1296 = vpop.f32.mrb[0].mxu0
        %1297 = vdwg.mxu0
        %v1298 = vsel %vm724, %v1293, -inf
        %1299 = vmax.xlane.f32.xlu0 %v1298
        %v1300 = vpop.xlane.xlu0 %1299
        %v1301 = vsub.f32 %v1293, %v1300
        %v1302 = vmul.f32 %v1301, 1.442695
        %v1303 = vpow.pop %v1302
        %v1304 = vsel %vm724, %v1303, 0.0
        %1305 = vadd.xlane.f32.xlu0 %v1304
        %v1306 = vpop.xlane.xlu0 %1305
        %v1307 = vrcp.pop %v1306
        %v1308 = vmul.f32 %v1303, %v1307
        %1309 = vst.msk [vmem:[%s569 + $0x10] sm:$0xff] %vm724, %v1308
        %v1310 = vpack.c.bf16 %v1308, %v1308
        %1311 = vrot.lane.b32.xlu0 %v1248, 64
        %v1312 = vpop.permute.xlu0 %1311
        %v1314 = vsel %vm724, %v1310, 0
        %v1317 = vsel %vm743, %v1312, 0
        %1319 = vmatprep.subr.bf16.mxu0 0
        %1320 = vmatpush1.bf16.msra.mxu0 %v1317
        %1321 = vmatprep.subr.bf16.mxu0 0
        %1322 = vmatpush1.bf16.msra.mxu0 0
        %1323 = vmatprep.subr.bf16.mxu0 0
        %1324 = vmatpush1.bf16.msra.mxu0 0
        %1325 = vmatprep.subr.bf16.mxu0 0
        %1326 = vmatpush1.bf16.msra.mxu0 0
        %1327 = vmatprep.subr.bf16.mxu0 0
        %1328 = vmatpush1.bf16.msra.mxu0 0
        %1329 = vmatprep.subr.bf16.mxu0 0
        %1330 = vmatpush1.bf16.msra.mxu0 0
        %1331 = vmatprep.subr.bf16.mxu0 0
        %1332 = vmatpush1.bf16.msra.mxu0 0
        %1333 = vmatprep.subr.bf16.mxu0 0
        %1334 = vmatpush1.bf16.msra.mxu0 0
        %1335 = vmatprep.subr.bf16.mxu0 0
        %1336 = vmatpush1.bf16.msra.mxu0 0
        %1337 = vmatprep.subr.bf16.mxu0 0
        %1338 = vmatpush1.bf16.msra.mxu0 0
        %1339 = vmatprep.subr.bf16.mxu0 0
        %1340 = vmatpush1.bf16.msra.mxu0 0
        %1341 = vmatprep.subr.bf16.mxu0 0
        %1342 = vmatpush1.bf16.msra.mxu0 0
        %1343 = vmatprep.subr.bf16.mxu0 0
        %1344 = vmatpush1.bf16.msra.mxu0 0
        %1345 = vmatprep.subr.bf16.mxu0 0
        %1346 = vmatpush1.bf16.msra.mxu0 0
        %1347 = vmatprep.subr.bf16.mxu0 0
        %1348 = vmatpush1.bf16.msra.mxu0 0
        %1349 = vmatprep.subr.bf16.mxu0 0
        %1350 = vmatpush1.bf16.msra.mxu0 0
        %1351 = vmatprep.mubr.bf16.mxu0 0
        %1352 = vmatmul.mubr.bf16.gmra.mrb[0].mxu0 %v1314
        %v1353 = vpop.f32.mrb[0].mxu0
        %v1354 = vadd.f32 0.0, %v1353
        %v1355 = vpop.f32.mrb[0].mxu0
        %v1356 = vpop.f32.mrb[0].mxu0
        %v1357 = vpop.f32.mrb[0].mxu0
        %1358 = vdwg.mxu0
        %1359 = vrot.lane.b32.xlu0 %v1248, 112
        %v1360 = vpop.permute.xlu0 %1359
        %1361 = vrot.lane.b32.xlu0 %v1248, 80
        %v1362 = vpop.permute.xlu0 %1361
        %v1364 = vsel %vm677, %v1360, 0
        %v1367 = vsel %vm677, %v1362, 0
        %1369 = vmatprep.subr.bf16.mxu0 0
        %1370 = vmatpush1.bf16.xpose.msra.mxu0 %v1367
        %1371 = vmatprep.subr.bf16.mxu0 0
        %1372 = vmatpush1.bf16.xpose.msra.mxu0 0
        %1373 = vmatprep.subr.bf16.mxu0 0
        %1374 = vmatpush1.bf16.xpose.msra.mxu0 0
        %1375 = vmatprep.subr.bf16.mxu0 0
        %1376 = vmatpush1.bf16.xpose.msra.mxu0 0
        %1377 = vmatprep.subr.bf16.mxu0 0
        %1378 = vmatpush1.bf16.xpose.msra.mxu0 0
        %1379 = vmatprep.subr.bf16.mxu0 0
        %1380 = vmatpush1.bf16.xpose.msra.mxu0 0
        %1381 = vmatprep.subr.bf16.mxu0 0
        %1382 = vmatpush1.bf16.xpose.msra.mxu0 0
        %1383 = vmatprep.subr.bf16.mxu0 0
        %1384 = vmatpush1.bf16.xpose.msra.mxu0 0
        %1385 = vmatprep.subr.bf16.mxu0 0
        %1386 = vmatpush1.bf16.xpose.msra.mxu0 0
        %1387 = vmatprep.subr.bf16.mxu0 0
        %1388 = vmatpush1.bf16.xpose.msra.mxu0 0
        %1389 = vmatprep.subr.bf16.mxu0 0
        %1390 = vmatpush1.bf16.xpose.msra.mxu0 0
        %1391 = vmatprep.subr.bf16.mxu0 0
        %1392 = vmatpush1.bf16.xpose.msra.mxu0 0
        %1393 = vmatprep.subr.bf16.mxu0 0
        %1394 = vmatpush1.bf16.xpose.msra.mxu0 0
        %1395 = vmatprep.subr.bf16.mxu0 0
        %1396 = vmatpush1.bf16.xpose.msra.mxu0 0
        %1397 = vmatprep.subr.bf16.mxu0 0
        %1398 = vmatpush1.bf16.xpose.msra.mxu0 0
        %1399 = vmatprep.subr.bf16.mxu0 0
        %1400 = vmatpush1.bf16.xpose.msra.mxu0 0
        %1401 = vmatprep.mubr.bf16.mxu0 0
        %1402 = vmatmul.mubr.bf16.gmra.mrb[0].mxu0 %v1364
        %v1403 = vpop.f32.mrb[0].mxu0
        %v1404 = vadd.f32 %v672, %v1403
        %v1405 = vpop.f32.mrb[0].mxu0
        %v1406 = vpop.f32.mrb[0].mxu0
        %v1407 = vpop.f32.mrb[0].mxu0
        %1408 = vdwg.mxu0
        %v1409 = vsel %vm724, %v1404, -inf
        %1410 = vmax.xlane.f32.xlu0 %v1409
        %v1411 = vpop.xlane.xlu0 %1410
        %v1412 = vsub.f32 %v1404, %v1411
        %v1413 = vmul.f32 %v1412, 1.442695
        %v1414 = vpow.pop %v1413
        %v1415 = vsel %vm724, %v1414, 0.0
        %1416 = vadd.xlane.f32.xlu0 %v1415
        %v1417 = vpop.xlane.xlu0 %1416
        %v1418 = vrcp.pop %v1417
        %v1419 = vmul.f32 %v1414, %v1418
        %1420 = vst.msk [vmem:[%s569 + $0x18] sm:$0xff] %vm724, %v1419
        %v1421 = vpack.c.bf16 %v1419, %v1419
        %1422 = vrot.lane.b32.xlu0 %v1248, 48
        %v1423 = vpop.permute.xlu0 %1422
        %v1425 = vsel %vm724, %v1421, 0
        %v1428 = vsel %vm743, %v1423, 0
        %1430 = vmatprep.subr.bf16.mxu0 0
        %1431 = vmatpush1.bf16.msra.mxu0 %v1428
        %1432 = vmatprep.subr.bf16.mxu0 0
        %1433 = vmatpush1.bf16.msra.mxu0 0
        %1434 = vmatprep.subr.bf16.mxu0 0
        %1435 = vmatpush1.bf16.msra.mxu0 0
        %1436 = vmatprep.subr.bf16.mxu0 0
        %1437 = vmatpush1.bf16.msra.mxu0 0
        %1438 = vmatprep.subr.bf16.mxu0 0
        %1439 = vmatpush1.bf16.msra.mxu0 0
        %1440 = vmatprep.subr.bf16.mxu0 0
        %1441 = vmatpush1.bf16.msra.mxu0 0
        %1442 = vmatprep.subr.bf16.mxu0 0
        %1443 = vmatpush1.bf16.msra.mxu0 0
        %1444 = vmatprep.subr.bf16.mxu0 0
        %1445 = vmatpush1.bf16.msra.mxu0 0
        %1446 = vmatprep.subr.bf16.mxu0 0
        %1447 = vmatpush1.bf16.msra.mxu0 0
        %1448 = vmatprep.subr.bf16.mxu0 0
        %1449 = vmatpush1.bf16.msra.mxu0 0
        %1450 = vmatprep.subr.bf16.mxu0 0
        %1451 = vmatpush1.bf16.msra.mxu0 0
        %1452 = vmatprep.subr.bf16.mxu0 0
        %1453 = vmatpush1.bf16.msra.mxu0 0
        %1454 = vmatprep.subr.bf16.mxu0 0
        %1455 = vmatpush1.bf16.msra.mxu0 0
        %1456 = vmatprep.subr.bf16.mxu0 0
        %1457 = vmatpush1.bf16.msra.mxu0 0
        %1458 = vmatprep.subr.bf16.mxu0 0
        %1459 = vmatpush1.bf16.msra.mxu0 0
        %1460 = vmatprep.subr.bf16.mxu0 0
        %1461 = vmatpush1.bf16.msra.mxu0 0
        %1462 = vmatprep.mubr.bf16.mxu0 0
        %1463 = vmatmul.mubr.bf16.gmra.mrb[0].mxu0 %v1425
        %v1464 = vpop.f32.mrb[0].mxu0
        %v1465 = vadd.f32 0.0, %v1464
        %v1466 = vpop.f32.mrb[0].mxu0
        %v1467 = vpop.f32.mrb[0].mxu0
        %v1468 = vpop.f32.mrb[0].mxu0
        %1469 = vdwg.mxu0
        %1471 = vrot.lane.b32.xlu0 %v1465, 16
        %v1472 = vpop.permute.xlu0 %1471
        %v1474 = vsel %vm677, %v1354, %v1472
        %s1475 = scalar_lea.vmem %s5, 16
        %v1476 = vld [vmem:[%s1475] sm:$0xf]
        %v1477 = vld [vmem:[%s1475 + $0x4] sm:$0xf]
        %v1478 = vld [vmem:[%s1475 + $0x8] sm:$0xf]
        %v1479 = vld [vmem:[%s1475 + $0xc] sm:$0xf]
        %s1480 = scalar_lea.vmem %s6, 1
        %v1481 = vld [vmem:[%s1480] sm:$0x1]
        %v1482 = vpack.c.bf16 %v1474, %v1474
        %v1484 = vlaneseq
        %v1485 = vshrl.u32 %v1484, 7
        %v1486 = vsub.s32 0, %v1485
        %v1487 = vrot.slane %v1481, %v1486
        %v1493 = vunpack.c.l.b16 %v1476
        %v1494 = vunpack.c.l.b16 %v1477
        %v1495 = vunpack.c.l.b16 %v1478
        %v1496 = vunpack.c.l.b16 %v1479
        %v1497 = vpack.c.b16 %v1494, %v1493
        %v1498 = vpack.c.b16 %v1496, %v1495
        %v1502 = vsel %vm575, %v1482, 0
        %1504 = vmatprep.subr.bf16.mxu0 0
        %1505 = vmatpush1.bf16.msra.mxu0 %v1497
        %1506 = vmatprep.subr.bf16.mxu0 0
        %1507 = vmatpush1.bf16.msra.mxu0 %v1498
        %1508 = vmatprep.subr.bf16.mxu0 0
        %1509 = vmatpush1.bf16.msra.mxu0 0
        %1510 = vmatprep.subr.bf16.mxu0 0
        %1511 = vmatpush1.bf16.msra.mxu0 0
        %1512 = vmatprep.subr.bf16.mxu0 0
        %1513 = vmatpush1.bf16.msra.mxu0 0
        %1514 = vmatprep.subr.bf16.mxu0 0
        %1515 = vmatpush1.bf16.msra.mxu0 0
        %1516 = vmatprep.subr.bf16.mxu0 0
        %1517 = vmatpush1.bf16.msra.mxu0 0
        %1518 = vmatprep.subr.bf16.mxu0 0
        %1519 = vmatpush1.bf16.msra.mxu0 0
        %1520 = vmatprep.subr.bf16.mxu0 0
        %1521 = vmatpush1.bf16.msra.mxu0 0
        %1522 = vmatprep.subr.bf16.mxu0 0
        %1523 = vmatpush1.bf16.msra.mxu0 0
        %1524 = vmatprep.subr.bf16.mxu0 0
        %1525 = vmatpush1.bf16.msra.mxu0 0
        %1526 = vmatprep.subr.bf16.mxu0 0
        %1527 = vmatpush1.bf16.msra.mxu0 0
        %1528 = vmatprep.subr.bf16.mxu0 0
        %1529 = vmatpush1.bf16.msra.mxu0 0
        %1530 = vmatprep.subr.bf16.mxu0 0
        %1531 = vmatpush1.bf16.msra.mxu0 0
        %1532 = vmatprep.subr.bf16.mxu0 0
        %1533 = vmatpush1.bf16.msra.mxu0 0
        %1534 = vmatprep.subr.bf16.mxu0 0
        %1535 = vmatpush1.bf16.msra.mxu0 0
        %1536 = vmatprep.mubr.bf16.mxu0 0
        %1537 = vmatmul.mubr.bf16.gmra.mrb[0].mxu0 %v1502
        %v1538 = vpop.f32.mrb[0].mxu0
        %v1539 = vadd.f32 %v1487, %v1538
        %v1540 = vpop.f32.mrb[0].mxu0
        %v1541 = vpop.f32.mrb[0].mxu0
        %v1542 = vpop.f32.mrb[0].mxu0
        %1543 = vdwg.mxu0
        %s1544 = scalar_lea.vmem %s11, 4
        %v1545 = vld [vmem:[%s1544] sm:$0xf]
        %v1546 = vadd.f32 %v1539, %v1178
        %v1547 = vsel %vm575, %v1546, 0.0
        %1548 = vadd.xlane.f32.xlu0 %v1547
        %v1549 = vpop.xlane.xlu0 %1548
        %v1550 = vmul.f32 %v1549, %v579
        %v1551 = vsub.f32 %v1546, %v1550
        %v1552 = vmul.f32 %v1551, %v1551
        %v1553 = vsel %vm575, %v1552, 0.0
        %1554 = vadd.xlane.f32.xlu0 %v1553
        %v1555 = vpop.xlane.xlu0 %1554
        %v1556 = vmul.f32 %v1555, %v579
        %v1557 = vadd.f32 %v1556, 1e-12
        %v1558 = vrsqrt.pop %v1557
        %v1559 = vmul.f32 %v1551, %v1558
        %v1560 = vlaneseq
        %v1561 = vshrl.u32 %v1560, 7
        %v1562 = vsub.s32 0, %v1561
        %v1563 = vrot.slane %v1545, %v1562
        %v1564 = vmul.f32 %v1559, %v1563
        %v1565 = vlaneseq
        %v1566 = vshrl.u32 %v1565, 7
        %v1567 = vsub.s32 1, %v1566
        %v1568 = vrot.slane %v1545, %v1567
        %v1569 = vadd.f32 %v1564, %v1568
        %s1570 = scalar_lea.vmem %s7, 16
        %v1571 = vld [vmem:[%s1570] sm:$0xf]
        %v1572 = vld [vmem:[%s1570 + $0x4] sm:$0xf]
        %v1573 = vld [vmem:[%s1570 + $0x8] sm:$0xf]
        %v1574 = vld [vmem:[%s1570 + $0xc] sm:$0xf]
        %s1575 = scalar_lea.vmem %s8, 1
        %v1576 = vld [vmem:[%s1575] sm:$0x1]
        %v1577 = vpack.c.bf16 %v1569, %v1569
        %v1579 = vlaneseq
        %v1580 = vshrl.u32 %v1579, 7
        %v1581 = vsub.s32 0, %v1580
        %v1582 = vrot.slane %v1576, %v1581
        %v1588 = vunpack.c.l.b16 %v1571
        %v1589 = vunpack.c.l.b16 %v1572
        %v1590 = vunpack.c.l.b16 %v1573
        %v1591 = vunpack.c.l.b16 %v1574
        %v1592 = vpack.c.b16 %v1589, %v1588
        %v1593 = vpack.c.b16 %v1591, %v1590
        %v1597 = vsel %vm575, %v1577, 0
        %1599 = vmatprep.subr.bf16.mxu0 0
        %1600 = vmatpush1.bf16.msra.mxu0 %v1592
        %1601 = vmatprep.subr.bf16.mxu0 0
        %1602 = vmatpush1.bf16.msra.mxu0 %v1593
        %1603 = vmatprep.subr.bf16.mxu0 0
        %1604 = vmatpush1.bf16.msra.mxu0 0
        %1605 = vmatprep.subr.bf16.mxu0 0
        %1606 = vmatpush1.bf16.msra.mxu0 0
        %1607 = vmatprep.subr.bf16.mxu0 0
        %1608 = vmatpush1.bf16.msra.mxu0 0
        %1609 = vmatprep.subr.bf16.mxu0 0
        %1610 = vmatpush1.bf16.msra.mxu0 0
        %1611 = vmatprep.subr.bf16.mxu0 0
        %1612 = vmatpush1.bf16.msra.mxu0 0
        %1613 = vmatprep.subr.bf16.mxu0 0
        %1614 = vmatpush1.bf16.msra.mxu0 0
        %1615 = vmatprep.subr.bf16.mxu0 0
        %1616 = vmatpush1.bf16.msra.mxu0 0
        %1617 = vmatprep.subr.bf16.mxu0 0
        %1618 = vmatpush1.bf16.msra.mxu0 0
        %1619 = vmatprep.subr.bf16.mxu0 0
        %1620 = vmatpush1.bf16.msra.mxu0 0
        %1621 = vmatprep.subr.bf16.mxu0 0
        %1622 = vmatpush1.bf16.msra.mxu0 0
        %1623 = vmatprep.subr.bf16.mxu0 0
        %1624 = vmatpush1.bf16.msra.mxu0 0
        %1625 = vmatprep.subr.bf16.mxu0 0
        %1626 = vmatpush1.bf16.msra.mxu0 0
        %1627 = vmatprep.subr.bf16.mxu0 0
        %1628 = vmatpush1.bf16.msra.mxu0 0
        %1629 = vmatprep.subr.bf16.mxu0 0
        %1630 = vmatpush1.bf16.msra.mxu0 0
        %1631 = vmatprep.mubr.bf16.mxu0 0
        %1632 = vmatmul.mubr.bf16.gmra.mrb[0].mxu0 %v1597
        %v1633 = vpop.f32.mrb[0].mxu0
        %v1634 = vadd.f32 %v1582, %v1633
        %v1635 = vpop.f32.mrb[0].mxu0
        %v1636 = vpop.f32.mrb[0].mxu0
        %v1637 = vpop.f32.mrb[0].mxu0
        %1638 = vdwg.mxu0
        %v1639 = vmul.f32 %v1634, 0.5
        %v1640 = vmul.f32 %v1634, 0.044715
        %v1641 = vmul.f32 %v1640, %v1634
        %v1642 = vmul.f32 %v1641, %v1634
        %v1643 = vadd.f32 %v1634, %v1642
        %v1644 = vmul.f32 %v1643, 0.7978846
        %v1645 = vtanh.pop %v1644
        %v1646 = vadd.f32 %v1645, 1.0
        %v1647 = vmul.f32 %v1639, %v1646
        %s1648 = scalar_lea.vmem %s9, 32
        %v1649 = vld [vmem:[%s1648] sm:$0xf]
        %v1650 = vld [vmem:[%s1648 + $0x4] sm:$0xf]
        %v1651 = vld [vmem:[%s1648 + $0x8] sm:$0xf]
        %v1652 = vld [vmem:[%s1648 + $0xc] sm:$0xf]
        %v1653 = vld [vmem:[%s1648 + $0x10] sm:$0xf]
        %v1654 = vld [vmem:[%s1648 + $0x14] sm:$0xf]
        %v1655 = vld [vmem:[%s1648 + $0x18] sm:$0xf]
        %v1656 = vld [vmem:[%s1648 + $0x1c] sm:$0xf]
        %s1657 = scalar_lea.vmem %s10, 1
        %v1658 = vld [vmem:[%s1657] sm:$0x1]
        %v1659 = vpack.c.bf16 %v1647, %v1647
        %v1661 = vlaneseq
        %v1662 = vshrl.u32 %v1661, 7
        %v1663 = vsub.s32 0, %v1662
        %v1664 = vrot.slane %v1658, %v1663
        %v1674 = vunpack.c.l.b16 %v1649
        %v1675 = vunpack.c.l.b16 %v1650
        %v1676 = vunpack.c.l.b16 %v1651
        %v1677 = vunpack.c.l.b16 %v1652
        %v1678 = vunpack.c.l.b16 %v1653
        %v1679 = vunpack.c.l.b16 %v1654
        %v1680 = vunpack.c.l.b16 %v1655
        %v1681 = vunpack.c.l.b16 %v1656
        %v1682 = vpack.c.b16 %v1675, %v1674
        %v1683 = vpack.c.b16 %v1677, %v1676
        %v1684 = vpack.c.b16 %v1679, %v1678
        %v1685 = vpack.c.b16 %v1681, %v1680
        %v1691 = vsel %vm1111, %v1659, 0
        %1693 = vmatprep.subr.bf16.mxu0 0
        %1694 = vmatpush1.bf16.msra.mxu0 %v1682
        %1695 = vmatprep.subr.bf16.mxu0 0
        %1696 = vmatpush1.bf16.msra.mxu0 %v1683
        %1697 = vmatprep.subr.bf16.mxu0 0
        %1698 = vmatpush1.bf16.msra.mxu0 %v1684
        %1699 = vmatprep.subr.bf16.mxu0 0
        %1700 = vmatpush1.bf16.msra.mxu0 %v1685
        %1701 = vmatprep.subr.bf16.mxu0 0
        %1702 = vmatpush1.bf16.msra.mxu0 0
        %1703 = vmatprep.subr.bf16.mxu0 0
        %1704 = vmatpush1.bf16.msra.mxu0 0
        %1705 = vmatprep.subr.bf16.mxu0 0
        %1706 = vmatpush1.bf16.msra.mxu0 0
        %1707 = vmatprep.subr.bf16.mxu0 0
        %1708 = vmatpush1.bf16.msra.mxu0 0
        %1709 = vmatprep.subr.bf16.mxu0 0
        %1710 = vmatpush1.bf16.msra.mxu0 0
        %1711 = vmatprep.subr.bf16.mxu0 0
        %1712 = vmatpush1.bf16.msra.mxu0 0
        %1713 = vmatprep.subr.bf16.mxu0 0
        %1714 = vmatpush1.bf16.msra.mxu0 0
        %1715 = vmatprep.subr.bf16.mxu0 0
        %1716 = vmatpush1.bf16.msra.mxu0 0
        %1717 = vmatprep.subr.bf16.mxu0 0
        %1718 = vmatpush1.bf16.msra.mxu0 0
        %1719 = vmatprep.subr.bf16.mxu0 0
        %1720 = vmatpush1.bf16.msra.mxu0 0
        %1721 = vmatprep.subr.bf16.mxu0 0
        %1722 = vmatpush1.bf16.msra.mxu0 0
        %1723 = vmatprep.subr.bf16.mxu0 0
        %1724 = vmatpush1.bf16.msra.mxu0 0
        %1725 = vmatprep.mubr.bf16.mxu0 0
        %1726 = vmatmul.mubr.bf16.gmra.mrb[0].mxu0 %v1691
        %v1727 = vpop.f32.mrb[0].mxu0
        %v1728 = vadd.f32 %v1664, %v1727
        %v1729 = vpop.f32.mrb[0].mxu0
        %v1730 = vpop.f32.mrb[0].mxu0
        %v1731 = vpop.f32.mrb[0].mxu0
        %1732 = vdwg.mxu0
        %v1733 = vadd.f32 %v1728, %v1569
        %v1734 = vsel %vm575, %v1733, 0.0
        %1735 = vadd.xlane.f32.xlu0 %v1734
        %v1736 = vpop.xlane.xlu0 %1735
        %v1737 = vmul.f32 %v1736, %v579
        %v1738 = vsub.f32 %v1733, %v1737
        %v1739 = vmul.f32 %v1738, %v1738
        %v1740 = vsel %vm575, %v1739, 0.0
        %1741 = vadd.xlane.f32.xlu0 %v1740
        %v1742 = vpop.xlane.xlu0 %1741
        %v1743 = vmul.f32 %v1742, %v579
        %v1744 = vadd.f32 %v1743, 1e-12
        %v1745 = vrsqrt.pop %v1744
        %v1746 = vmul.f32 %v1738, %v1745
        %v1747 = vlaneseq
        %v1748 = vshrl.u32 %v1747, 7
        %v1749 = vsub.s32 2, %v1748
        %v1750 = vrot.slane %v1545, %v1749
        %v1751 = vmul.f32 %v1746, %v1750
        %v1752 = vlaneseq
        %v1753 = vshrl.u32 %v1752, 7
        %v1754 = vsub.s32 3, %v1753
        %v1755 = vrot.slane %v1545, %v1754
        %v1756 = vadd.f32 %v1751, %v1755
        %v1757 = vld [vmem:[%s12] sm:$0xf]
        %v1758 = vld [vmem:[%s12 + $0x4] sm:$0xf]
        %v1759 = vld [vmem:[%s12 + $0x8] sm:$0xf]
        %v1760 = vld [vmem:[%s12 + $0xc] sm:$0xf]
        %v1761 = vld [vmem:[%s13] sm:$0x1]
        %v1762 = vpack.c.bf16 %v1756, %v1756
        %v1767 = vunpack.c.l.b16 %v1757
        %v1768 = vunpack.c.l.b16 %v1758
        %v1769 = vunpack.c.l.b16 %v1759
        %v1770 = vunpack.c.l.b16 %v1760
        %v1771 = vpack.c.b16 %v1768, %v1767
        %v1772 = vpack.c.b16 %v1770, %v1769
        %v1776 = vsel %vm575, %v1762, 0
        %1778 = vmatprep.subr.bf16.mxu0 0
        %1779 = vmatpush1.bf16.msra.mxu0 %v1771
        %1780 = vmatprep.subr.bf16.mxu0 0
        %1781 = vmatpush1.bf16.msra.mxu0 %v1772
        %1782 = vmatprep.subr.bf16.mxu0 0
        %1783 = vmatpush1.bf16.msra.mxu0 0
        %1784 = vmatprep.subr.bf16.mxu0 0
        %1785 = vmatpush1.bf16.msra.mxu0 0
        %1786 = vmatprep.subr.bf16.mxu0 0
        %1787 = vmatpush1.bf16.msra.mxu0 0
        %1788 = vmatprep.subr.bf16.mxu0 0
        %1789 = vmatpush1.bf16.msra.mxu0 0
        %1790 = vmatprep.subr.bf16.mxu0 0
        %1791 = vmatpush1.bf16.msra.mxu0 0
        %1792 = vmatprep.subr.bf16.mxu0 0
        %1793 = vmatpush1.bf16.msra.mxu0 0
        %1794 = vmatprep.subr.bf16.mxu0 0
        %1795 = vmatpush1.bf16.msra.mxu0 0
        %1796 = vmatprep.subr.bf16.mxu0 0
        %1797 = vmatpush1.bf16.msra.mxu0 0
        %1798 = vmatprep.subr.bf16.mxu0 0
        %1799 = vmatpush1.bf16.msra.mxu0 0
        %1800 = vmatprep.subr.bf16.mxu0 0
        %1801 = vmatpush1.bf16.msra.mxu0 0
        %1802 = vmatprep.subr.bf16.mxu0 0
        %1803 = vmatpush1.bf16.msra.mxu0 0
        %1804 = vmatprep.subr.bf16.mxu0 0
        %1805 = vmatpush1.bf16.msra.mxu0 0
        %1806 = vmatprep.subr.bf16.mxu0 0
        %1807 = vmatpush1.bf16.msra.mxu0 0
        %1808 = vmatprep.subr.bf16.mxu0 0
        %1809 = vmatpush1.bf16.msra.mxu0 0
        %1810 = vmatprep.mubr.bf16.mxu0 0
        %1811 = vmatmul.mubr.bf16.gmra.mrb[0].mxu0 %v1776
        %v1812 = vpop.f32.mrb[0].mxu0
        %v1813 = vadd.f32 %v1761, %v1812
        %v1814 = vpop.f32.mrb[0].mxu0
        %v1815 = vpop.f32.mrb[0].mxu0
        %v1816 = vpop.f32.mrb[0].mxu0
        %1817 = vdwg.mxu0
        %v1818 = vtanh.pop %v1813
        %v1819 = vld [vmem:[%s14] sm:$0xf]
        %v1820 = vld [vmem:[%s14 + $0x4] sm:$0xf]
        %v1821 = vld [vmem:[%s14 + $0x8] sm:$0xf]
        %v1822 = vld [vmem:[%s14 + $0xc] sm:$0xf]
        %v1823 = vld [vmem:[%s15] sm:$0x1]
        %v1824 = vpack.c.bf16 %v1818, %v1818
        %v1829 = vunpack.c.l.b16 %v1819
        %v1830 = vunpack.c.l.b16 %v1820
        %v1831 = vunpack.c.l.b16 %v1821
        %v1832 = vunpack.c.l.b16 %v1822
        %v1833 = vpack.c.b16 %v1830, %v1829
        %v1834 = vpack.c.b16 %v1832, %v1831
        %v1838 = vsel %vm575, %v1824, 0
        %1840 = vmatprep.subr.bf16.mxu0 0
        %1841 = vmatpush1.bf16.msra.mxu0 %v1833
        %1842 = vmatprep.subr.bf16.mxu0 0
        %1843 = vmatpush1.bf16.msra.mxu0 %v1834
        %1844 = vmatprep.subr.bf16.mxu0 0
        %1845 = vmatpush1.bf16.msra.mxu0 0
        %1846 = vmatprep.subr.bf16.mxu0 0
        %1847 = vmatpush1.bf16.msra.mxu0 0
        %1848 = vmatprep.subr.bf16.mxu0 0
        %1849 = vmatpush1.bf16.msra.mxu0 0
        %1850 = vmatprep.subr.bf16.mxu0 0
        %1851 = vmatpush1.bf16.msra.mxu0 0
        %1852 = vmatprep.subr.bf16.mxu0 0
        %1853 = vmatpush1.bf16.msra.mxu0 0
        %1854 = vmatprep.subr.bf16.mxu0 0
        %1855 = vmatpush1.bf16.msra.mxu0 0
        %1856 = vmatprep.subr.bf16.mxu0 0
        %1857 = vmatpush1.bf16.msra.mxu0 0
        %1858 = vmatprep.subr.bf16.mxu0 0
        %1859 = vmatpush1.bf16.msra.mxu0 0
        %1860 = vmatprep.subr.bf16.mxu0 0
        %1861 = vmatpush1.bf16.msra.mxu0 0
        %1862 = vmatprep.subr.bf16.mxu0 0
        %1863 = vmatpush1.bf16.msra.mxu0 0
        %1864 = vmatprep.subr.bf16.mxu0 0
        %1865 = vmatpush1.bf16.msra.mxu0 0
        %1866 = vmatprep.subr.bf16.mxu0 0
        %1867 = vmatpush1.bf16.msra.mxu0 0
        %1868 = vmatprep.subr.bf16.mxu0 0
        %1869 = vmatpush1.bf16.msra.mxu0 0
        %1870 = vmatprep.subr.bf16.mxu0 0
        %1871 = vmatpush1.bf16.msra.mxu0 0
        %1872 = vmatprep.mubr.bf16.mxu0 0
        %1873 = vmatmul.mubr.bf16.gmra.mrb[0].mxu0 %v1838
        %v1874 = vpop.f32.mrb[0].mxu0
        %v1875 = vadd.f32 %v1823, %v1874
        %v1876 = vpop.f32.mrb[0].mxu0
        %v1877 = vpop.f32.mrb[0].mxu0
        %v1878 = vpop.f32.mrb[0].mxu0
        %1879 = vdwg.mxu0
        %1880 = vst [vmem:[%s550] sm:$0x1] %v1875
        %s1881 = sand.u32 %s386, 1
        %s1882 = scalar_lea.sflag [#allocation3], %s1881
        %s1883 = sand.u32 %s386, 1
        %s1884 = scalar_lea.vmem [#allocation2], %s1883
        %p1885 = scmp.lt.s32.totalorder %s32, 1
        %s1886 = scalar_select %p1885, %s32, 1
        %s1887 = smul.addr %s1886, 4
        %s1888 = smul.addr %s1887, 8
        %s1889 = scalar_lea.vmem %s17, %s1888
        // Predicated region
        $region85: #{bert_classifier_forward.1} parent=83 // pred_check
          %p1890 = pneg %p396
        $region86: #{bert_classifier_forward.1} parent=83 // pred_check_branch
          %1892 = sbr.rel (%p1890) target = $region88
        $region87: #{bert_classifier_forward.1} parent=83 // pred_region
          %s1894 = ssub.s32 16, 16
          %1895 = vsyncadd %s1882, %s1894
          %s1896 = smul.addr %s32, 16
          %s1897 = scalar_lea.hbm %s16, %s1896
          %s1899 = sshll.u32 %s1884, 4
          %s1900 = int_to_ptr.vmem [resolvable:$true] %s1899
          %1902 = dma.vmem_to_hbm [thread:$0]  %s1900, 16, %s1897, %s1882
        $region88: #{bert_classifier_forward.1} parent=83 // pred_fallthru
          _
        // Predicated region
        $region89: #{bert_classifier_forward.1} parent=83 // pred_check
          %p1903 = pneg %p422
        $region90: #{bert_classifier_forward.1} parent=83 // pred_check_branch
          %1905 = sbr.rel (%p1903) target = $region92
        $region91: #{bert_classifier_forward.1} parent=83 // pred_region
          _
        $region92: #{bert_classifier_forward.1} parent=83 // pred_fallthru
          _
      $region84: #{bert_classifier_forward.1} parent=5 // pred_fallthru
        _
      %p1906 = scmp.le.s32.totalorder 2, %s27
      // Predicated region
      $region93: #{bert_classifier_forward.1} parent=5 // pred_check
        %p1907 = pneg %p1906
      $region94: #{bert_classifier_forward.1} parent=5 // pred_check_branch
        %1909 = sbr.rel (%p1907) target = $region96
      $region95: #{bert_classifier_forward.1} parent=5 // pred_region
        %s1910 = ssub.s32 %s27, 2
        // Predicated region
        $region97: #{bert_classifier_forward.1} parent=95 // pred_check
          %p1911 = pneg %p402
        $region98: #{bert_classifier_forward.1} parent=95 // pred_check_branch
          %1913 = sbr.rel (%p1911) target = $region100
        $region99: #{bert_classifier_forward.1} parent=95 // pred_region
          %s1914 = sand.u32 %s387, 1
          %s1915 = scalar_lea.sflag [#allocation3], %s1914
          %s1916 = sand.u32 %s387, 1
          %s1917 = scalar_lea.vmem [#allocation2], %s1916
          %1918 = dma.done %s1915, 16
        $region100: #{bert_classifier_forward.1} parent=95 // pred_fallthru
          _
        // Predicated region
        $region101: #{bert_classifier_forward.1} parent=95 // pred_check
          %p1919 = pneg %p428
        $region102: #{bert_classifier_forward.1} parent=95 // pred_check_branch
          %1921 = sbr.rel (%p1919) target = $region104
        $region103: #{bert_classifier_forward.1} parent=95 // pred_region
          %p1922 = scmp.lt.s32.totalorder %s33, 1
          %s1923 = scalar_select %p1922, %s33, 1
          %s1924 = smul.addr %s1923, 4
          %s1925 = smul.addr %s1924, 8
          %s1926 = scalar_lea.vmem %s17, %s1925
        $region104: #{bert_classifier_forward.1} parent=95 // pred_fallthru
          _
      $region96: #{bert_classifier_forward.1} parent=5 // pred_fallthru
        _
    $region6: #{bert_classifier_forward.1} parent=1 // loop_footer
      %s31 = sadd.s32 1, %s27
    $region7: #{bert_classifier_forward.1} parent=1 // loop_footer_branch
      %26 = sbr.rel target = $region3
    $region8: #{bert_classifier_forward.1} parent=1 // loop_exit
      _
    %1927 = vsyncpa [#allocation3], 1
    %s1928 = scalar_lea.sflag [#allocation3], 1
    %1929 = vsyncpa %s1928, 1

</llo_original>
